<compile_context>
chip_gen: v7x
topology: tpu7x:2x2x1
jax: 0.10.0
libtpu: 0.0.40
codegen_flags: <defaults>
</compile_context>

<pallas_src>
import math
import jax
import jax.numpy as jnp
from jax.experimental import pallas as pl
from jax.experimental.pallas import tpu as pltpu


def _round_up(n, m):
    return ((n + m - 1) // m) * m


def _make_lstm_kernel(T, Bbp, Hp, Yp):
    """Per-batch-block kernel: single-layer LSTM over T steps, then
    logit = h_T @ fc_w^T + fc_b (the ouput_last=True branch)."""

    def kernel(x_ref, wih_ref, whh_ref, b_ref, fcw_ref, fcb_ref, out_ref):
        # ---- Input projection for all timesteps at once: one big MXU matmul,
        # bias (b_ih + b_hh) added once, hoisted out of the recurrence loop.
        # proj stays a value (vregs / compiler-managed spills), no scratch.
        proj = jnp.dot(x_ref[0], wih_ref[...],
                       preferred_element_type=jnp.float32) + b_ref[...]

        h = jnp.zeros((Bbp, Hp), jnp.float32)                # h_0 = 0
        c = jnp.zeros((Bbp, Hp), jnp.float32)                # c_0 = 0

        # ---- Recurrence: fully unrolled, static sublane-aligned proj slices,
        # h/c carried as values (no VMEM round-trips on the serial chain).
        for t in range(T):
            gates = proj[t * Bbp:(t + 1) * Bbp, :] + jnp.dot(
                h, whh_ref[...], preferred_element_type=jnp.float32)
            i_g = jax.nn.sigmoid(gates[:, 0:Hp])             # PyTorch gate order
            f_g = jax.nn.sigmoid(gates[:, Hp:2 * Hp])        # i, f, g, o
            g_g = jnp.tanh(gates[:, 2 * Hp:3 * Hp])
            o_g = jax.nn.sigmoid(gates[:, 3 * Hp:4 * Hp])
            c = f_g * c + i_g * g_g
            h = o_g * jnp.tanh(c)

        # ---- logit = fc(h_n): lane-dense (Bbp, Yp) unmasked store.
        out_ref[0] = jnp.dot(h, fcw_ref[...],
                             preferred_element_type=jnp.float32) + fcb_ref[...]

    return kernel


def lstm4struct_forward(x, target, params, num_batch_blocks=1):
    """Full forward: LSTM -> fc(h_n) -> cross-entropy (ouput_last=True).

    num_batch_blocks: keep 1 on v5e/v6e; use >=2 on v7x (when B allows) so the
    'parallel' grid axis shards across the two TensorCores.
    """
    B, T, I = x.shape
    H = params["w_hh"].shape[1]
    Y = params["fc_w"].shape[0]
    NB = num_batch_blocks
    assert B % NB == 0
    Bb = B // NB

    # Padded, lane/sublane-dense dims (all padding is exact-zero, see below).
    Hp = _round_up(H, 128)        # 32  -> 128: full-width gate slices / h / c
    Ip = _round_up(I, 128)        # 208 -> 256: clean x tiles, MXU K=256
    Yp = _round_up(Y, 128)        # 8   -> 128: unmasked output store
    Bbp = _round_up(Bb, 8)        # 2   -> 8:   sublane-aligned per-step slices
    H4p = 4 * Hp

    # Time-major, batch-blocked, zero-padded input: block g holds samples
    # [g*Bb, (g+1)*Bb). NOTE: this transpose/reshape is an extra HBM round-trip
    # of x done by XLA outside the kernel pipeline (negligible at demo sizes).
    xf = x.astype(jnp.float32).reshape(NB, Bb, T, I)
    xf = jnp.pad(xf, ((0, 0), (0, Bbp - Bb), (0, 0), (0, Ip - I)))
    xb = jnp.transpose(xf, (0, 2, 1, 3)).reshape(NB, T * Bbp, Ip)

    # Pre-transposed / pre-combined / zero-padded weights (wrapper-side, free).
    def pad_gate_cols(w_t):       # (K, 4H) -> (K, 4Hp), per-gate column padding
        K = w_t.shape[0]
        return jnp.pad(w_t.reshape(K, 4, H),
                       ((0, 0), (0, 0), (0, Hp - H))).reshape(K, H4p)

    wih_t = jnp.pad(pad_gate_cols(params["w_ih"].T.astype(jnp.float32)),
                    ((0, Ip - I), (0, 0)))                    # (Ip, 4Hp)
    whh_t = jnp.pad(pad_gate_cols(params["w_hh"].T.astype(jnp.float32)),
                    ((0, Hp - H), (0, 0)))                    # (Hp, 4Hp)
    bias = jnp.pad((params["b_ih"] + params["b_hh"]).astype(jnp.float32)
                   .reshape(4, H), ((0, 0), (0, Hp - H))).reshape(1, H4p)
    fcw_t = jnp.pad(params["fc_w"].T.astype(jnp.float32),
                    ((0, Hp - H), (0, Yp - Y)))               # (Hp, Yp)
    fcb = jnp.pad(params["fc_b"].astype(jnp.float32).reshape(1, Y),
                  ((0, 0), (0, Yp - Y)))                      # (1, Yp)
    # Padded gate lanes get bias 0 -> i=f=o=0.5, g=tanh(0)=0, so padded h/c
    # lanes remain exactly 0 for all t (no leakage into real lanes).

    out = pl.pallas_call(
        _make_lstm_kernel(T, Bbp, Hp, Yp),
        out_shape=jax.ShapeDtypeStruct((NB, Bbp, Yp), jnp.float32),
        grid_spec=pltpu.PrefetchScalarGridSpec(
            num_scalar_prefetch=0,
            grid=(NB,),
            in_specs=[
                pl.BlockSpec((1, T * Bbp, Ip), lambda g: (g, 0, 0)),
                pl.BlockSpec((Ip, H4p), lambda g: (0, 0)),
                pl.BlockSpec((Hp, H4p), lambda g: (0, 0)),
                pl.BlockSpec((1, H4p), lambda g: (0, 0)),
                pl.BlockSpec((Hp, Yp), lambda g: (0, 0)),
                pl.BlockSpec((1, Yp), lambda g: (0, 0)),
            ],
            out_specs=pl.BlockSpec((1, Bbp, Yp), lambda g: (g, 0, 0)),
        ),
        compiler_params=pltpu.CompilerParams(
            dimension_semantics=("parallel",)),
    )(xb, wih_t, whh_t, bias, fcw_t, fcb)

    logits = out[:, :Bb, :Y].reshape(B, Y)

    # F.cross_entropy (mean reduction) on the logits, done as XLA glue.
    logz = jax.nn.logsumexp(logits, axis=1)
    nll = logz - jnp.take_along_axis(logits, target[:, None], axis=1)[:, 0]
    loss = jnp.mean(nll)
    return logits, loss
    # TODO(synk): the ouput_last=False branch (per-label attention over h with
    # U.weight + dropout) is not exercised by the default constructor and is
    # not implemented in the kernel.


def lstm4struct_reference(x, target, params):
    """Pure-JAX reference mirroring the PyTorch forward (for validation)."""
    B, T, I = x.shape
    H = params["w_hh"].shape[1]
    wih, whh = params["w_ih"], params["w_hh"]
    bih, bhh = params["b_ih"], params["b_hh"]

    def step(carry, xt):
        h, c = carry
        gates = xt @ wih.T + bih + h @ whh.T + bhh
        i = jax.nn.sigmoid(gates[:, :H])
        f = jax.nn.sigmoid(gates[:, H:2 * H])
        g = jnp.tanh(gates[:, 2 * H:3 * H])
        o = jax.nn.sigmoid(gates[:, 3 * H:])
        c = f * c + i * g
        h = o * jnp.tanh(c)
        return (h, c), None

    h0 = jnp.zeros((B, H), jnp.float32)
    c0 = jnp.zeros((B, H), jnp.float32)
    (h_n, _), _ = jax.lax.scan(step, (h0, c0),
                               jnp.transpose(x.astype(jnp.float32), (1, 0, 2)))

    logit = h_n @ params["fc_w"].T + params["fc_b"]          # fc(h_n.squeeze())
    logz = jax.nn.logsumexp(logit, axis=1)
    nll = logz - jnp.take_along_axis(logit, target[:, None], axis=1)[:, 0]
    return logit, jnp.mean(nll)


def init_params(key, I, H, Y):
    ks = jax.random.split(key, 8)
    k = 1.0 / math.sqrt(H)                                   # PyTorch LSTM default

    def unif(kk, shape, bound):
        return jax.random.uniform(kk, shape, jnp.float32, -bound, bound)

    def xavier(kk, shape):
        fan_out, fan_in = shape
        a = math.sqrt(6.0 / (fan_in + fan_out))
        return jax.random.uniform(kk, shape, jnp.float32, -a, a)

    w_ih = unif(ks[0], (4 * H, I), k)                        # torch layout (4H, I)
    w_hh = unif(ks[1], (4 * H, H), k)                        # torch layout (4H, H)
    b_ih = unif(ks[2], (4 * H,), k)
    b_hh = unif(ks[3], (4 * H,), k)
    U_w = xavier(ks[4], (Y, H))                              # unused (ouput_last=True)
    fc_w = xavier(ks[5], (Y, H))
    fc_b = unif(ks[6], (Y,), 1.0 / math.sqrt(H))
    return dict(w_ih=w_ih, w_hh=w_hh, b_ih=b_ih, b_hh=b_hh,
                U_w=U_w, fc_w=fc_w, fc_b=fc_b)


if __name__ == "__main__":
    # args: input_size=208 (fixed by the module), hidden_size=32, Y=8
    I, H, Y = 208, 32, 8
    B, T = 2, 8

    key = jax.random.PRNGKey(0)
    k_param, k_x, k_tgt = jax.random.split(key, 3)
    params = init_params(k_param, I, H, Y)
    x = jax.random.normal(k_x, (B, T, I), jnp.float32)
    target = jax.random.randint(k_tgt, (B,), 0, Y, dtype=jnp.int32)

    logits, loss = lstm4struct_forward(x, target, params)
    logits, loss = jax.block_until_ready((logits, loss))

    ref_logits, ref_loss = lstm4struct_reference(x, target, params)
    assert jnp.allclose(logits, ref_logits, rtol=1e-3, atol=1e-4), "logit mismatch"
    assert jnp.allclose(loss, ref_loss, rtol=1e-3, atol=1e-4), "loss mismatch"
    print("KERNEL_OK")
</pallas_src>

<mosaic_0001>
module attributes {stable_mosaic.version = 11 : i64} {
  func.func @kernel(%arg0: i32, %arg1: memref<1x64x256xf32, #tpu.memory_space<vmem>>, %arg2: memref<256x512xf32, #tpu.memory_space<vmem>>, %arg3: memref<128x512xf32, #tpu.memory_space<vmem>>, %arg4: memref<1x512xf32, #tpu.memory_space<vmem>>, %arg5: memref<128x128xf32, #tpu.memory_space<vmem>>, %arg6: memref<1x128xf32, #tpu.memory_space<vmem>>, %arg7: memref<1x8x128xf32, #tpu.memory_space<vmem>>) attributes {dimension_semantics = [#tpu.dimension_semantics<parallel>], iteration_bounds = array<i64: 1>, scalar_prefetch = 0 : i64, scratch_operands = 0 : i64, tpu.core_type = #tpu.core_type<tc>, window_params = [{transform_indices = @transform_0, window_bounds = array<i64: 1, 64, 256>}, {pipeline_mode = #tpu.pipeline_mode<synchronous>, transform_indices = @transform_1, window_bounds = array<i64: 256, 512>}, {pipeline_mode = #tpu.pipeline_mode<synchronous>, transform_indices = @transform_2, window_bounds = array<i64: 128, 512>}, {pipeline_mode = #tpu.pipeline_mode<synchronous>, transform_indices = @transform_3, window_bounds = array<i64: 1, 512>}, {pipeline_mode = #tpu.pipeline_mode<synchronous>, transform_indices = @transform_4, window_bounds = array<i64: 128, 128>}, {pipeline_mode = #tpu.pipeline_mode<synchronous>, transform_indices = @transform_5, window_bounds = array<i64: 1, 128>}, {transform_indices = @transform_6, window_bounds = array<i64: 1, 8, 128>}]} {
    %c0 = arith.constant 0 : index
    %c0_0 = arith.constant 0 : index
    %c0_1 = arith.constant 0 : index
    %0 = vector.load %arg1[%c0, %c0_0, %c0_1] : memref<1x64x256xf32, #tpu.memory_space<vmem>>, vector<1x64x256xf32>
    %1 = vector.shape_cast %0 : vector<1x64x256xf32> to vector<64x256xf32>
    %c0_2 = arith.constant 0 : index
    %c0_3 = arith.constant 0 : index
    %2 = vector.load %arg2[%c0_2, %c0_3] : memref<256x512xf32, #tpu.memory_space<vmem>>, vector<256x512xf32>
    %cst = arith.constant dense<0.000000e+00> : vector<64x512xf32>
    %3 = tpu.matmul %1, %2, %cst {dimension_numbers = #tpu.dot_dimension_numbers<[1], [0], [0], [1], [0, 0, 1, 1], [], []>} : vector<64x256xf32>, vector<256x512xf32>, vector<64x512xf32> -> vector<64x512xf32>
    %c0_4 = arith.constant 0 : index
    %c0_5 = arith.constant 0 : index
    %4 = vector.load %arg4[%c0_4, %c0_5] : memref<1x512xf32, #tpu.memory_space<vmem>>, vector<1x512xf32>
    %5 = vector.broadcast %4 : vector<1x512xf32> to vector<64x512xf32>
    %6 = arith.addf %3, %5 : vector<64x512xf32>
    %cst_6 = arith.constant 0.000000e+00 : f32
    %7 = vector.broadcast %cst_6 : f32 to vector<8x128xf32>
    %cst_7 = arith.constant 0.000000e+00 : f32
    %8 = vector.broadcast %cst_7 : f32 to vector<8x128xf32>
    %9 = vector.extract_strided_slice %6 {offsets = [0, 0], sizes = [8, 512], strides = [1, 1]} : vector<64x512xf32> to vector<8x512xf32>
    %c0_8 = arith.constant 0 : index
    %c0_9 = arith.constant 0 : index
    %10 = vector.load %arg3[%c0_8, %c0_9] : memref<128x512xf32, #tpu.memory_space<vmem>>, vector<128x512xf32>
    %cst_10 = arith.constant dense<0.000000e+00> : vector<8x512xf32>
    %11 = tpu.matmul %7, %10, %cst_10 {dimension_numbers = #tpu.dot_dimension_numbers<[1], [0], [0], [1], [0, 0, 1, 1], [], []>} : vector<8x128xf32>, vector<128x512xf32>, vector<8x512xf32> -> vector<8x512xf32>
    %12 = arith.addf %9, %11 : vector<8x512xf32>
    %13 = vector.extract_strided_slice %12 {offsets = [0, 0], sizes = [8, 128], strides = [1, 1]} : vector<8x512xf32> to vector<8x128xf32>
    %14 = arith.negf %13 : vector<8x128xf32>
    %15 = math.exp %14 : vector<8x128xf32>
    %cst_11 = arith.constant 1.000000e+00 : f32
    %16 = vector.broadcast %cst_11 : f32 to vector<8x128xf32>
    %17 = arith.addf %16, %15 : vector<8x128xf32>
    %18 = arith.divf %16, %17 : vector<8x128xf32>
    %19 = vector.extract_strided_slice %12 {offsets = [0, 128], sizes = [8, 128], strides = [1, 1]} : vector<8x512xf32> to vector<8x128xf32>
    %20 = arith.negf %19 : vector<8x128xf32>
    %21 = math.exp %20 : vector<8x128xf32>
    %cst_12 = arith.constant 1.000000e+00 : f32
    %22 = vector.broadcast %cst_12 : f32 to vector<8x128xf32>
    %23 = arith.addf %22, %21 : vector<8x128xf32>
    %24 = arith.divf %22, %23 : vector<8x128xf32>
    %25 = vector.extract_strided_slice %12 {offsets = [0, 256], sizes = [8, 128], strides = [1, 1]} : vector<8x512xf32> to vector<8x128xf32>
    %26 = math.tanh %25 : vector<8x128xf32>
    %27 = vector.extract_strided_slice %12 {offsets = [0, 384], sizes = [8, 128], strides = [1, 1]} : vector<8x512xf32> to vector<8x128xf32>
    %28 = arith.negf %27 : vector<8x128xf32>
    %29 = math.exp %28 : vector<8x128xf32>
    %cst_13 = arith.constant 1.000000e+00 : f32
    %30 = vector.broadcast %cst_13 : f32 to vector<8x128xf32>
    %31 = arith.addf %30, %29 : vector<8x128xf32>
    %32 = arith.divf %30, %31 : vector<8x128xf32>
    %33 = arith.mulf %24, %8 : vector<8x128xf32>
    %34 = arith.mulf %18, %26 : vector<8x128xf32>
    %35 = arith.addf %33, %34 : vector<8x128xf32>
    %36 = math.tanh %35 : vector<8x128xf32>
    %37 = arith.mulf %32, %36 : vector<8x128xf32>
    %38 = vector.extract_strided_slice %6 {offsets = [8, 0], sizes = [8, 512], strides = [1, 1]} : vector<64x512xf32> to vector<8x512xf32>
    %c0_14 = arith.constant 0 : index
    %c0_15 = arith.constant 0 : index
    %39 = vector.load %arg3[%c0_14, %c0_15] : memref<128x512xf32, #tpu.memory_space<vmem>>, vector<128x512xf32>
    %cst_16 = arith.constant dense<0.000000e+00> : vector<8x512xf32>
    %40 = tpu.matmul %37, %39, %cst_16 {dimension_numbers = #tpu.dot_dimension_numbers<[1], [0], [0], [1], [0, 0, 1, 1], [], []>} : vector<8x128xf32>, vector<128x512xf32>, vector<8x512xf32> -> vector<8x512xf32>
    %41 = arith.addf %38, %40 : vector<8x512xf32>
    %42 = vector.extract_strided_slice %41 {offsets = [0, 0], sizes = [8, 128], strides = [1, 1]} : vector<8x512xf32> to vector<8x128xf32>
    %43 = arith.negf %42 : vector<8x128xf32>
    %44 = math.exp %43 : vector<8x128xf32>
    %cst_17 = arith.constant 1.000000e+00 : f32
    %45 = vector.broadcast %cst_17 : f32 to vector<8x128xf32>
    %46 = arith.addf %45, %44 : vector<8x128xf32>
    %47 = arith.divf %45, %46 : vector<8x128xf32>
    %48 = vector.extract_strided_slice %41 {offsets = [0, 128], sizes = [8, 128], strides = [1, 1]} : vector<8x512xf32> to vector<8x128xf32>
    %49 = arith.negf %48 : vector<8x128xf32>
    %50 = math.exp %49 : vector<8x128xf32>
    %cst_18 = arith.constant 1.000000e+00 : f32
    %51 = vector.broadcast %cst_18 : f32 to vector<8x128xf32>
    %52 = arith.addf %51, %50 : vector<8x128xf32>
    %53 = arith.divf %51, %52 : vector<8x128xf32>
    %54 = vector.extract_strided_slice %41 {offsets = [0, 256], sizes = [8, 128], strides = [1, 1]} : vector<8x512xf32> to vector<8x128xf32>
    %55 = math.tanh %54 : vector<8x128xf32>
    %56 = vector.extract_strided_slice %41 {offsets = [0, 384], sizes = [8, 128], strides = [1, 1]} : vector<8x512xf32> to vector<8x128xf32>
    %57 = arith.negf %56 : vector<8x128xf32>
    %58 = math.exp %57 : vector<8x128xf32>
    %cst_19 = arith.constant 1.000000e+00 : f32
    %59 = vector.broadcast %cst_19 : f32 to vector<8x128xf32>
    %60 = arith.addf %59, %58 : vector<8x128xf32>
    %61 = arith.divf %59, %60 : vector<8x128xf32>
    %62 = arith.mulf %53, %35 : vector<8x128xf32>
    %63 = arith.mulf %47, %55 : vector<8x128xf32>
    %64 = arith.addf %62, %63 : vector<8x128xf32>
    %65 = math.tanh %64 : vector<8x128xf32>
    %66 = arith.mulf %61, %65 : vector<8x128xf32>
    %67 = vector.extract_strided_slice %6 {offsets = [16, 0], sizes = [8, 512], strides = [1, 1]} : vector<64x512xf32> to vector<8x512xf32>
    %c0_20 = arith.constant 0 : index
    %c0_21 = arith.constant 0 : index
    %68 = vector.load %arg3[%c0_20, %c0_21] : memref<128x512xf32, #tpu.memory_space<vmem>>, vector<128x512xf32>
    %cst_22 = arith.constant dense<0.000000e+00> : vector<8x512xf32>
    %69 = tpu.matmul %66, %68, %cst_22 {dimension_numbers = #tpu.dot_dimension_numbers<[1], [0], [0], [1], [0, 0, 1, 1], [], []>} : vector<8x128xf32>, vector<128x512xf32>, vector<8x512xf32> -> vector<8x512xf32>
    %70 = arith.addf %67, %69 : vector<8x512xf32>
    %71 = vector.extract_strided_slice %70 {offsets = [0, 0], sizes = [8, 128], strides = [1, 1]} : vector<8x512xf32> to vector<8x128xf32>
    %72 = arith.negf %71 : vector<8x128xf32>
    %73 = math.exp %72 : vector<8x128xf32>
    %cst_23 = arith.constant 1.000000e+00 : f32
    %74 = vector.broadcast %cst_23 : f32 to vector<8x128xf32>
    %75 = arith.addf %74, %73 : vector<8x128xf32>
    %76 = arith.divf %74, %75 : vector<8x128xf32>
    %77 = vector.extract_strided_slice %70 {offsets = [0, 128], sizes = [8, 128], strides = [1, 1]} : vector<8x512xf32> to vector<8x128xf32>
    %78 = arith.negf %77 : vector<8x128xf32>
    %79 = math.exp %78 : vector<8x128xf32>
    %cst_24 = arith.constant 1.000000e+00 : f32
    %80 = vector.broadcast %cst_24 : f32 to vector<8x128xf32>
    %81 = arith.addf %80, %79 : vector<8x128xf32>
    %82 = arith.divf %80, %81 : vector<8x128xf32>
    %83 = vector.extract_strided_slice %70 {offsets = [0, 256], sizes = [8, 128], strides = [1, 1]} : vector<8x512xf32> to vector<8x128xf32>
    %84 = math.tanh %83 : vector<8x128xf32>
    %85 = vector.extract_strided_slice %70 {offsets = [0, 384], sizes = [8, 128], strides = [1, 1]} : vector<8x512xf32> to vector<8x128xf32>
    %86 = arith.negf %85 : vector<8x128xf32>
    %87 = math.exp %86 : vector<8x128xf32>
    %cst_25 = arith.constant 1.000000e+00 : f32
    %88 = vector.broadcast %cst_25 : f32 to vector<8x128xf32>
    %89 = arith.addf %88, %87 : vector<8x128xf32>
    %90 = arith.divf %88, %89 : vector<8x128xf32>
    %91 = arith.mulf %82, %64 : vector<8x128xf32>
    %92 = arith.mulf %76, %84 : vector<8x128xf32>
    %93 = arith.addf %91, %92 : vector<8x128xf32>
    %94 = math.tanh %93 : vector<8x128xf32>
    %95 = arith.mulf %90, %94 : vector<8x128xf32>
    %96 = vector.extract_strided_slice %6 {offsets = [24, 0], sizes = [8, 512], strides = [1, 1]} : vector<64x512xf32> to vector<8x512xf32>
    %c0_26 = arith.constant 0 : index
    %c0_27 = arith.constant 0 : index
    %97 = vector.load %arg3[%c0_26, %c0_27] : memref<128x512xf32, #tpu.memory_space<vmem>>, vector<128x512xf32>
    %cst_28 = arith.constant dense<0.000000e+00> : vector<8x512xf32>
    %98 = tpu.matmul %95, %97, %cst_28 {dimension_numbers = #tpu.dot_dimension_numbers<[1], [0], [0], [1], [0, 0, 1, 1], [], []>} : vector<8x128xf32>, vector<128x512xf32>, vector<8x512xf32> -> vector<8x512xf32>
    %99 = arith.addf %96, %98 : vector<8x512xf32>
    %100 = vector.extract_strided_slice %99 {offsets = [0, 0], sizes = [8, 128], strides = [1, 1]} : vector<8x512xf32> to vector<8x128xf32>
    %101 = arith.negf %100 : vector<8x128xf32>
    %102 = math.exp %101 : vector<8x128xf32>
    %cst_29 = arith.constant 1.000000e+00 : f32
    %103 = vector.broadcast %cst_29 : f32 to vector<8x128xf32>
    %104 = arith.addf %103, %102 : vector<8x128xf32>
    %105 = arith.divf %103, %104 : vector<8x128xf32>
    %106 = vector.extract_strided_slice %99 {offsets = [0, 128], sizes = [8, 128], strides = [1, 1]} : vector<8x512xf32> to vector<8x128xf32>
    %107 = arith.negf %106 : vector<8x128xf32>
    %108 = math.exp %107 : vector<8x128xf32>
    %cst_30 = arith.constant 1.000000e+00 : f32
    %109 = vector.broadcast %cst_30 : f32 to vector<8x128xf32>
    %110 = arith.addf %109, %108 : vector<8x128xf32>
    %111 = arith.divf %109, %110 : vector<8x128xf32>
    %112 = vector.extract_strided_slice %99 {offsets = [0, 256], sizes = [8, 128], strides = [1, 1]} : vector<8x512xf32> to vector<8x128xf32>
    %113 = math.tanh %112 : vector<8x128xf32>
    %114 = vector.extract_strided_slice %99 {offsets = [0, 384], sizes = [8, 128], strides = [1, 1]} : vector<8x512xf32> to vector<8x128xf32>
    %115 = arith.negf %114 : vector<8x128xf32>
    %116 = math.exp %115 : vector<8x128xf32>
    %cst_31 = arith.constant 1.000000e+00 : f32
    %117 = vector.broadcast %cst_31 : f32 to vector<8x128xf32>
    %118 = arith.addf %117, %116 : vector<8x128xf32>
    %119 = arith.divf %117, %118 : vector<8x128xf32>
    %120 = arith.mulf %111, %93 : vector<8x128xf32>
    %121 = arith.mulf %105, %113 : vector<8x128xf32>
    %122 = arith.addf %120, %121 : vector<8x128xf32>
    %123 = math.tanh %122 : vector<8x128xf32>
    %124 = arith.mulf %119, %123 : vector<8x128xf32>
    %125 = vector.extract_strided_slice %6 {offsets = [32, 0], sizes = [8, 512], strides = [1, 1]} : vector<64x512xf32> to vector<8x512xf32>
    %c0_32 = arith.constant 0 : index
    %c0_33 = arith.constant 0 : index
    %126 = vector.load %arg3[%c0_32, %c0_33] : memref<128x512xf32, #tpu.memory_space<vmem>>, vector<128x512xf32>
    %cst_34 = arith.constant dense<0.000000e+00> : vector<8x512xf32>
    %127 = tpu.matmul %124, %126, %cst_34 {dimension_numbers = #tpu.dot_dimension_numbers<[1], [0], [0], [1], [0, 0, 1, 1], [], []>} : vector<8x128xf32>, vector<128x512xf32>, vector<8x512xf32> -> vector<8x512xf32>
    %128 = arith.addf %125, %127 : vector<8x512xf32>
    %129 = vector.extract_strided_slice %128 {offsets = [0, 0], sizes = [8, 128], strides = [1, 1]} : vector<8x512xf32> to vector<8x128xf32>
    %130 = arith.negf %129 : vector<8x128xf32>
    %131 = math.exp %130 : vector<8x128xf32>
    %cst_35 = arith.constant 1.000000e+00 : f32
    %132 = vector.broadcast %cst_35 : f32 to vector<8x128xf32>
    %133 = arith.addf %132, %131 : vector<8x128xf32>
    %134 = arith.divf %132, %133 : vector<8x128xf32>
    %135 = vector.extract_strided_slice %128 {offsets = [0, 128], sizes = [8, 128], strides = [1, 1]} : vector<8x512xf32> to vector<8x128xf32>
    %136 = arith.negf %135 : vector<8x128xf32>
    %137 = math.exp %136 : vector<8x128xf32>
    %cst_36 = arith.constant 1.000000e+00 : f32
    %138 = vector.broadcast %cst_36 : f32 to vector<8x128xf32>
    %139 = arith.addf %138, %137 : vector<8x128xf32>
    %140 = arith.divf %138, %139 : vector<8x128xf32>
    %141 = vector.extract_strided_slice %128 {offsets = [0, 256], sizes = [8, 128], strides = [1, 1]} : vector<8x512xf32> to vector<8x128xf32>
    %142 = math.tanh %141 : vector<8x128xf32>
    %143 = vector.extract_strided_slice %128 {offsets = [0, 384], sizes = [8, 128], strides = [1, 1]} : vector<8x512xf32> to vector<8x128xf32>
    %144 = arith.negf %143 : vector<8x128xf32>
    %145 = math.exp %144 : vector<8x128xf32>
    %cst_37 = arith.constant 1.000000e+00 : f32
    %146 = vector.broadcast %cst_37 : f32 to vector<8x128xf32>
    %147 = arith.addf %146, %145 : vector<8x128xf32>
    %148 = arith.divf %146, %147 : vector<8x128xf32>
    %149 = arith.mulf %140, %122 : vector<8x128xf32>
    %150 = arith.mulf %134, %142 : vector<8x128xf32>
    %151 = arith.addf %149, %150 : vector<8x128xf32>
    %152 = math.tanh %151 : vector<8x128xf32>
    %153 = arith.mulf %148, %152 : vector<8x128xf32>
    %154 = vector.extract_strided_slice %6 {offsets = [40, 0], sizes = [8, 512], strides = [1, 1]} : vector<64x512xf32> to vector<8x512xf32>
    %c0_38 = arith.constant 0 : index
    %c0_39 = arith.constant 0 : index
    %155 = vector.load %arg3[%c0_38, %c0_39] : memref<128x512xf32, #tpu.memory_space<vmem>>, vector<128x512xf32>
    %cst_40 = arith.constant dense<0.000000e+00> : vector<8x512xf32>
    %156 = tpu.matmul %153, %155, %cst_40 {dimension_numbers = #tpu.dot_dimension_numbers<[1], [0], [0], [1], [0, 0, 1, 1], [], []>} : vector<8x128xf32>, vector<128x512xf32>, vector<8x512xf32> -> vector<8x512xf32>
    %157 = arith.addf %154, %156 : vector<8x512xf32>
    %158 = vector.extract_strided_slice %157 {offsets = [0, 0], sizes = [8, 128], strides = [1, 1]} : vector<8x512xf32> to vector<8x128xf32>
    %159 = arith.negf %158 : vector<8x128xf32>
    %160 = math.exp %159 : vector<8x128xf32>
    %cst_41 = arith.constant 1.000000e+00 : f32
    %161 = vector.broadcast %cst_41 : f32 to vector<8x128xf32>
    %162 = arith.addf %161, %160 : vector<8x128xf32>
    %163 = arith.divf %161, %162 : vector<8x128xf32>
    %164 = vector.extract_strided_slice %157 {offsets = [0, 128], sizes = [8, 128], strides = [1, 1]} : vector<8x512xf32> to vector<8x128xf32>
    %165 = arith.negf %164 : vector<8x128xf32>
    %166 = math.exp %165 : vector<8x128xf32>
    %cst_42 = arith.constant 1.000000e+00 : f32
    %167 = vector.broadcast %cst_42 : f32 to vector<8x128xf32>
    %168 = arith.addf %167, %166 : vector<8x128xf32>
    %169 = arith.divf %167, %168 : vector<8x128xf32>
    %170 = vector.extract_strided_slice %157 {offsets = [0, 256], sizes = [8, 128], strides = [1, 1]} : vector<8x512xf32> to vector<8x128xf32>
    %171 = math.tanh %170 : vector<8x128xf32>
    %172 = vector.extract_strided_slice %157 {offsets = [0, 384], sizes = [8, 128], strides = [1, 1]} : vector<8x512xf32> to vector<8x128xf32>
    %173 = arith.negf %172 : vector<8x128xf32>
    %174 = math.exp %173 : vector<8x128xf32>
    %cst_43 = arith.constant 1.000000e+00 : f32
    %175 = vector.broadcast %cst_43 : f32 to vector<8x128xf32>
    %176 = arith.addf %175, %174 : vector<8x128xf32>
    %177 = arith.divf %175, %176 : vector<8x128xf32>
    %178 = arith.mulf %169, %151 : vector<8x128xf32>
    %179 = arith.mulf %163, %171 : vector<8x128xf32>
    %180 = arith.addf %178, %179 : vector<8x128xf32>
    %181 = math.tanh %180 : vector<8x128xf32>
    %182 = arith.mulf %177, %181 : vector<8x128xf32>
    %183 = vector.extract_strided_slice %6 {offsets = [48, 0], sizes = [8, 512], strides = [1, 1]} : vector<64x512xf32> to vector<8x512xf32>
    %c0_44 = arith.constant 0 : index
    %c0_45 = arith.constant 0 : index
    %184 = vector.load %arg3[%c0_44, %c0_45] : memref<128x512xf32, #tpu.memory_space<vmem>>, vector<128x512xf32>
    %cst_46 = arith.constant dense<0.000000e+00> : vector<8x512xf32>
    %185 = tpu.matmul %182, %184, %cst_46 {dimension_numbers = #tpu.dot_dimension_numbers<[1], [0], [0], [1], [0, 0, 1, 1], [], []>} : vector<8x128xf32>, vector<128x512xf32>, vector<8x512xf32> -> vector<8x512xf32>
    %186 = arith.addf %183, %185 : vector<8x512xf32>
    %187 = vector.extract_strided_slice %186 {offsets = [0, 0], sizes = [8, 128], strides = [1, 1]} : vector<8x512xf32> to vector<8x128xf32>
    %188 = arith.negf %187 : vector<8x128xf32>
    %189 = math.exp %188 : vector<8x128xf32>
    %cst_47 = arith.constant 1.000000e+00 : f32
    %190 = vector.broadcast %cst_47 : f32 to vector<8x128xf32>
    %191 = arith.addf %190, %189 : vector<8x128xf32>
    %192 = arith.divf %190, %191 : vector<8x128xf32>
    %193 = vector.extract_strided_slice %186 {offsets = [0, 128], sizes = [8, 128], strides = [1, 1]} : vector<8x512xf32> to vector<8x128xf32>
    %194 = arith.negf %193 : vector<8x128xf32>
    %195 = math.exp %194 : vector<8x128xf32>
    %cst_48 = arith.constant 1.000000e+00 : f32
    %196 = vector.broadcast %cst_48 : f32 to vector<8x128xf32>
    %197 = arith.addf %196, %195 : vector<8x128xf32>
    %198 = arith.divf %196, %197 : vector<8x128xf32>
    %199 = vector.extract_strided_slice %186 {offsets = [0, 256], sizes = [8, 128], strides = [1, 1]} : vector<8x512xf32> to vector<8x128xf32>
    %200 = math.tanh %199 : vector<8x128xf32>
    %201 = vector.extract_strided_slice %186 {offsets = [0, 384], sizes = [8, 128], strides = [1, 1]} : vector<8x512xf32> to vector<8x128xf32>
    %202 = arith.negf %201 : vector<8x128xf32>
    %203 = math.exp %202 : vector<8x128xf32>
    %cst_49 = arith.constant 1.000000e+00 : f32
    %204 = vector.broadcast %cst_49 : f32 to vector<8x128xf32>
    %205 = arith.addf %204, %203 : vector<8x128xf32>
    %206 = arith.divf %204, %205 : vector<8x128xf32>
    %207 = arith.mulf %198, %180 : vector<8x128xf32>
    %208 = arith.mulf %192, %200 : vector<8x128xf32>
    %209 = arith.addf %207, %208 : vector<8x128xf32>
    %210 = math.tanh %209 : vector<8x128xf32>
    %211 = arith.mulf %206, %210 : vector<8x128xf32>
    %212 = vector.extract_strided_slice %6 {offsets = [56, 0], sizes = [8, 512], strides = [1, 1]} : vector<64x512xf32> to vector<8x512xf32>
    %c0_50 = arith.constant 0 : index
    %c0_51 = arith.constant 0 : index
    %213 = vector.load %arg3[%c0_50, %c0_51] : memref<128x512xf32, #tpu.memory_space<vmem>>, vector<128x512xf32>
    %cst_52 = arith.constant dense<0.000000e+00> : vector<8x512xf32>
    %214 = tpu.matmul %211, %213, %cst_52 {dimension_numbers = #tpu.dot_dimension_numbers<[1], [0], [0], [1], [0, 0, 1, 1], [], []>} : vector<8x128xf32>, vector<128x512xf32>, vector<8x512xf32> -> vector<8x512xf32>
    %215 = arith.addf %212, %214 : vector<8x512xf32>
    %216 = vector.extract_strided_slice %215 {offsets = [0, 0], sizes = [8, 128], strides = [1, 1]} : vector<8x512xf32> to vector<8x128xf32>
    %217 = arith.negf %216 : vector<8x128xf32>
    %218 = math.exp %217 : vector<8x128xf32>
    %cst_53 = arith.constant 1.000000e+00 : f32
    %219 = vector.broadcast %cst_53 : f32 to vector<8x128xf32>
    %220 = arith.addf %219, %218 : vector<8x128xf32>
    %221 = arith.divf %219, %220 : vector<8x128xf32>
    %222 = vector.extract_strided_slice %215 {offsets = [0, 128], sizes = [8, 128], strides = [1, 1]} : vector<8x512xf32> to vector<8x128xf32>
    %223 = arith.negf %222 : vector<8x128xf32>
    %224 = math.exp %223 : vector<8x128xf32>
    %cst_54 = arith.constant 1.000000e+00 : f32
    %225 = vector.broadcast %cst_54 : f32 to vector<8x128xf32>
    %226 = arith.addf %225, %224 : vector<8x128xf32>
    %227 = arith.divf %225, %226 : vector<8x128xf32>
    %228 = vector.extract_strided_slice %215 {offsets = [0, 256], sizes = [8, 128], strides = [1, 1]} : vector<8x512xf32> to vector<8x128xf32>
    %229 = math.tanh %228 : vector<8x128xf32>
    %230 = vector.extract_strided_slice %215 {offsets = [0, 384], sizes = [8, 128], strides = [1, 1]} : vector<8x512xf32> to vector<8x128xf32>
    %231 = arith.negf %230 : vector<8x128xf32>
    %232 = math.exp %231 : vector<8x128xf32>
    %cst_55 = arith.constant 1.000000e+00 : f32
    %233 = vector.broadcast %cst_55 : f32 to vector<8x128xf32>
    %234 = arith.addf %233, %232 : vector<8x128xf32>
    %235 = arith.divf %233, %234 : vector<8x128xf32>
    %236 = arith.mulf %227, %209 : vector<8x128xf32>
    %237 = arith.mulf %221, %229 : vector<8x128xf32>
    %238 = arith.addf %236, %237 : vector<8x128xf32>
    %239 = math.tanh %238 : vector<8x128xf32>
    %240 = arith.mulf %235, %239 : vector<8x128xf32>
    %c0_56 = arith.constant 0 : index
    %c0_57 = arith.constant 0 : index
    %241 = vector.load %arg5[%c0_56, %c0_57] : memref<128x128xf32, #tpu.memory_space<vmem>>, vector<128x128xf32>
    %cst_58 = arith.constant dense<0.000000e+00> : vector<8x128xf32>
    %242 = tpu.matmul %240, %241, %cst_58 {dimension_numbers = #tpu.dot_dimension_numbers<[1], [0], [0], [1], [0, 0, 1, 1], [], []>} : vector<8x128xf32>, vector<128x128xf32>, vector<8x128xf32> -> vector<8x128xf32>
    %c0_59 = arith.constant 0 : index
    %c0_60 = arith.constant 0 : index
    %243 = vector.load %arg6[%c0_59, %c0_60] : memref<1x128xf32, #tpu.memory_space<vmem>>, vector<1x128xf32>
    %244 = vector.broadcast %243 : vector<1x128xf32> to vector<8x128xf32>
    %245 = arith.addf %242, %244 : vector<8x128xf32>
    %c0_61 = arith.constant 0 : index
    %c0_62 = arith.constant 0 : index
    %c0_63 = arith.constant 0 : index
    %246 = vector.load %arg7[%c0_61, %c0_62, %c0_63] : memref<1x8x128xf32, #tpu.memory_space<vmem>>, vector<1x8x128xf32>
    %247 = vector.shape_cast %246 : vector<1x8x128xf32> to vector<8x128xf32>
    %248 = vector.shape_cast %245 : vector<8x128xf32> to vector<1x8x128xf32>
    tpu.vector_store %arg7[%c0_61, %c0_62, %c0_63], %248 {strides = array<i32>} : memref<1x8x128xf32, #tpu.memory_space<vmem>>, vector<1x8x128xf32>,
    return
  }
  func.func @transform_0(%arg0: i32) -> (i32, i32, i32) {
    %c0_i32 = arith.constant 0 : i32
    %c0_i32_0 = arith.constant 0 : i32
    %c0_i32_1 = arith.constant 0 : i32
    return %arg0, %c0_i32, %c0_i32_0 : i32, i32, i32
  }
  func.func @transform_1(%arg0: i32) -> (i32, i32) {
    %c0_i32 = arith.constant 0 : i32
    %c0_i32_0 = arith.constant 0 : i32
    %c0_i32_1 = arith.constant 0 : i32
    return %c0_i32, %c0_i32_0 : i32, i32
  }
  func.func @transform_2(%arg0: i32) -> (i32, i32) {
    %c0_i32 = arith.constant 0 : i32
    %c0_i32_0 = arith.constant 0 : i32
    %c0_i32_1 = arith.constant 0 : i32
    return %c0_i32, %c0_i32_0 : i32, i32
  }
  func.func @transform_3(%arg0: i32) -> (i32, i32) {
    %c0_i32 = arith.constant 0 : i32
    %c0_i32_0 = arith.constant 0 : i32
    %c0_i32_1 = arith.constant 0 : i32
    return %c0_i32, %c0_i32_0 : i32, i32
  }
  func.func @transform_4(%arg0: i32) -> (i32, i32) {
    %c0_i32 = arith.constant 0 : i32
    %c0_i32_0 = arith.constant 0 : i32
    %c0_i32_1 = arith.constant 0 : i32
    return %c0_i32, %c0_i32_0 : i32, i32
  }
  func.func @transform_5(%arg0: i32) -> (i32, i32) {
    %c0_i32 = arith.constant 0 : i32
    %c0_i32_0 = arith.constant 0 : i32
    %c0_i32_1 = arith.constant 0 : i32
    return %c0_i32, %c0_i32_0 : i32, i32
  }
  func.func @transform_6(%arg0: i32) -> (i32, i32, i32) {
    %c0_i32 = arith.constant 0 : i32
    %c0_i32_0 = arith.constant 0 : i32
    %c0_i32_1 = arith.constant 0 : i32
    return %arg0, %c0_i32, %c0_i32_0 : i32, i32, i32
  }
}

</mosaic_0001>

<llo_original>
// kernel: tpu_custom_call.1
$region0: #{tpu_custom_call.1}
  #allocation0 [shape = 'u32[]', space=smem, size = 0x4, offset = 0x4, fixed_abs, tag = 'smem constant byte address 0x4 - core index']
  #allocation1 [shape = 'u32[144,128]{1,0:T(1,128)}', space=vmem, size = 0x12000, scoped, tag = 'internal scratch']
  %s0 = inlined_call_operand.hbm [shape: f32[1,64,256], index: 0, kind: input, shape index: {}]
  %s1 = inlined_call_operand.hbm [shape: f32[256,512], index: 1, kind: input, shape index: {}]
  %s2 = inlined_call_operand.hbm [shape: f32[128,512], index: 2, kind: input, shape index: {}]
  %s3 = inlined_call_operand.vmem [shape: f32[1,512], index: 3, kind: input, shape index: {}]
  %s4 = inlined_call_operand.hbm [shape: f32[128,128], index: 4, kind: input, shape index: {}]
  %s5 = inlined_call_operand.vmem [shape: f32[1,128], index: 5, kind: input, shape index: {}]
  %s6 = inlined_call_operand.hbm [shape: f32[1,8,128], index: 6, kind: output, shape index: {}]
  %s7 = sld [smem:[#allocation0]]
  $region50: #{tpu_custom_call.1} parent=0
    _
  %s9 = ssub.s32 1, %s7
  %s10 = scalar_select 0, %s9, %s7
  $region1: #{tpu_custom_call.1} parent=0
    #allocation2 [shape = 'u8[65536]{0}', space=vmem, size = 0x10000, scoped, tag = 'input window, operand 0, single buffered']
    #allocation3 [shape = 's32[1]{0}', space=sflag, size = 0x4, scoped, tag = 'scoped memory for tpu_custom_call.1']
    #allocation4 [shape = 's32[1]{0}', space=sflag, size = 0x4, scoped, tag = 'scoped memory for tpu_custom_call.1']
    #allocation5 [shape = 'u8[524288]{0}', space=vmem, size = 0x80000, scoped, tag = 'input window, operand 1, single buffered']
    #allocation6 [shape = 's32[1]{0}', space=sflag, size = 0x4, scoped, tag = 'scoped memory for tpu_custom_call.1']
    #allocation7 [shape = 'u8[262144]{0}', space=vmem, size = 0x40000, scoped, tag = 'input window, operand 2, single buffered']
    #allocation8 [shape = 'u8[65536]{0}', space=vmem, size = 0x10000, scoped, tag = 'input window, operand 4, single buffered']
    #allocation9 [shape = 's32[1]{0}', space=sflag, size = 0x4, scoped, tag = 'scoped memory for tpu_custom_call.1']
    #allocation10 [shape = 'u8[4096]{0}', space=vmem, size = 0x1000, scoped, tag = 'output window, operand 0, single buffered']
    %11 = vsyncpa [#allocation3], 0
    %12 = vsyncpa [#allocation6], 0
    %13 = vsyncpa [#allocation9], 0
    %14 = vsyncpa [#allocation4], 0
    // Predicated region
    $region2: #{tpu_custom_call.1} parent=1 // pred_check
      _
    $region3: #{tpu_custom_call.1} parent=1 // pred_check_branch
      %16 = sbr.rel (0) target = $region5
    $region4: #{tpu_custom_call.1} parent=1 // pred_region
      %s18 = ssub.s32 2048, 2048
      %19 = vsyncadd [#allocation3], %s18
      %s20 = sshll.u32 [#allocation2], 4
      %s21 = int_to_ptr.vmem [resolvable:$true] %s20
      %26 = dma.hbm_to_vmem [thread:$0]  %s0, 2048, %s21, [#allocation3], 256, 256, 16
    $region5: #{tpu_custom_call.1} parent=1 // pred_fallthru
      _
    // Predicated region
    $region6: #{tpu_custom_call.1} parent=1 // pred_check
      _
    $region7: #{tpu_custom_call.1} parent=1 // pred_check_branch
      %28 = sbr.rel (0) target = $region9
    $region8: #{tpu_custom_call.1} parent=1 // pred_region
      %s30 = ssub.s32 16384, 16384
      %31 = vsyncadd [#allocation6], %s30
      %s32 = sshll.u32 [#allocation5], 4
      %s33 = int_to_ptr.vmem [resolvable:$true] %s32
      %38 = dma.hbm_to_vmem [thread:$0]  %s1, 16384, %s33, [#allocation6], 512, 512, 32
    $region9: #{tpu_custom_call.1} parent=1 // pred_fallthru
      _
    // Predicated region
    $region10: #{tpu_custom_call.1} parent=1 // pred_check
      _
    $region11: #{tpu_custom_call.1} parent=1 // pred_check_branch
      %40 = sbr.rel (0) target = $region13
    $region12: #{tpu_custom_call.1} parent=1 // pred_region
      %s42 = ssub.s32 8192, 8192
      %43 = vsyncadd [#allocation6], %s42
      %s44 = sshll.u32 [#allocation7], 4
      %s45 = int_to_ptr.vmem [resolvable:$true] %s44
      %50 = dma.hbm_to_vmem [thread:$0]  %s2, 8192, %s45, [#allocation6], 512, 512, 32
    $region13: #{tpu_custom_call.1} parent=1 // pred_fallthru
      _
    // Predicated region
    $region14: #{tpu_custom_call.1} parent=1 // pred_check
      _
    $region15: #{tpu_custom_call.1} parent=1 // pred_check_branch
      %52 = sbr.rel (0) target = $region17
    $region16: #{tpu_custom_call.1} parent=1 // pred_region
      _
    $region17: #{tpu_custom_call.1} parent=1 // pred_fallthru
      _
    // Predicated region
    $region18: #{tpu_custom_call.1} parent=1 // pred_check
      _
    $region19: #{tpu_custom_call.1} parent=1 // pred_check_branch
      %54 = sbr.rel (0) target = $region21
    $region20: #{tpu_custom_call.1} parent=1 // pred_region
      %s56 = ssub.s32 2048, 2048
      %57 = vsyncadd [#allocation9], %s56
      %s58 = sshll.u32 [#allocation8], 4
      %s59 = int_to_ptr.vmem [resolvable:$true] %s58
      %64 = dma.hbm_to_vmem [thread:$0]  %s4, 2048, %s59, [#allocation9], 128, 128, 8
    $region21: #{tpu_custom_call.1} parent=1 // pred_fallthru
      _
    // Predicated region
    $region22: #{tpu_custom_call.1} parent=1 // pred_check
      _
    $region23: #{tpu_custom_call.1} parent=1 // pred_check_branch
      %66 = sbr.rel (0) target = $region25
    $region24: #{tpu_custom_call.1} parent=1 // pred_region
      _
    $region25: #{tpu_custom_call.1} parent=1 // pred_fallthru
      _
    // Predicated region
    $region26: #{tpu_custom_call.1} parent=1 // pred_check
      _
    $region27: #{tpu_custom_call.1} parent=1 // pred_check_branch
      %68 = sbr.rel (0) target = $region29
    $region28: #{tpu_custom_call.1} parent=1 // pred_region
      %69 = dma.done [#allocation3], 2048
    $region29: #{tpu_custom_call.1} parent=1 // pred_fallthru
      _
    // Predicated region
    $region30: #{tpu_custom_call.1} parent=1 // pred_check
      _
    $region31: #{tpu_custom_call.1} parent=1 // pred_check_branch
      %71 = sbr.rel (0) target = $region33
    $region32: #{tpu_custom_call.1} parent=1 // pred_region
      %72 = dma.done [#allocation6], 16384
    $region33: #{tpu_custom_call.1} parent=1 // pred_fallthru
      _
    // Predicated region
    $region34: #{tpu_custom_call.1} parent=1 // pred_check
      _
    $region35: #{tpu_custom_call.1} parent=1 // pred_check_branch
      %74 = sbr.rel (0) target = $region37
    $region36: #{tpu_custom_call.1} parent=1 // pred_region
      %75 = dma.done [#allocation6], 8192
    $region37: #{tpu_custom_call.1} parent=1 // pred_fallthru
      _
    // Predicated region
    $region38: #{tpu_custom_call.1} parent=1 // pred_check
      _
    $region39: #{tpu_custom_call.1} parent=1 // pred_check_branch
      %77 = sbr.rel (0) target = $region41
    $region40: #{tpu_custom_call.1} parent=1 // pred_region
      %78 = dma.done [#allocation9], 2048
    $region41: #{tpu_custom_call.1} parent=1 // pred_fallthru
      _
    %v79 = vld [vmem:[#allocation2] sm:$0xff]
    %v80 = vld [vmem:[#allocation2 + $0x8] sm:$0xff]
    %v81 = vld [vmem:[#allocation2 + $0x10] sm:$0xff]
    %v82 = vld [vmem:[#allocation2 + $0x18] sm:$0xff]
    %v83 = vld [vmem:[#allocation2 + $0x20] sm:$0xff]
    %v84 = vld [vmem:[#allocation2 + $0x28] sm:$0xff]
    %v85 = vld [vmem:[#allocation2 + $0x30] sm:$0xff]
    %v86 = vld [vmem:[#allocation2 + $0x38] sm:$0xff]
    %v87 = vld [vmem:[#allocation2 + $0x40] sm:$0xff]
    %v88 = vld [vmem:[#allocation2 + $0x48] sm:$0xff]
    %v89 = vld [vmem:[#allocation2 + $0x50] sm:$0xff]
    %v90 = vld [vmem:[#allocation2 + $0x58] sm:$0xff]
    %v91 = vld [vmem:[#allocation2 + $0x60] sm:$0xff]
    %v92 = vld [vmem:[#allocation2 + $0x68] sm:$0xff]
    %v93 = vld [vmem:[#allocation2 + $0x70] sm:$0xff]
    %v94 = vld [vmem:[#allocation2 + $0x78] sm:$0xff]
    %v95 = vld [vmem:[#allocation5] sm:$0xff]
    %v96 = vld [vmem:[#allocation5 + $0x8] sm:$0xff]
    %v97 = vld [vmem:[#allocation5 + $0x10] sm:$0xff]
    %v98 = vld [vmem:[#allocation5 + $0x18] sm:$0xff]
    %v99 = vld [vmem:[#allocation5 + $0x20] sm:$0xff]
    %v100 = vld [vmem:[#allocation5 + $0x28] sm:$0xff]
    %v101 = vld [vmem:[#allocation5 + $0x30] sm:$0xff]
    %v102 = vld [vmem:[#allocation5 + $0x38] sm:$0xff]
    %v103 = vld [vmem:[#allocation5 + $0x40] sm:$0xff]
    %v104 = vld [vmem:[#allocation5 + $0x48] sm:$0xff]
    %v105 = vld [vmem:[#allocation5 + $0x50] sm:$0xff]
    %v106 = vld [vmem:[#allocation5 + $0x58] sm:$0xff]
    %v107 = vld [vmem:[#allocation5 + $0x60] sm:$0xff]
    %v108 = vld [vmem:[#allocation5 + $0x68] sm:$0xff]
    %v109 = vld [vmem:[#allocation5 + $0x70] sm:$0xff]
    %v110 = vld [vmem:[#allocation5 + $0x78] sm:$0xff]
    %v111 = vld [vmem:[#allocation5 + $0x80] sm:$0xff]
    %v112 = vld [vmem:[#allocation5 + $0x88] sm:$0xff]
    %v113 = vld [vmem:[#allocation5 + $0x90] sm:$0xff]
    %v114 = vld [vmem:[#allocation5 + $0x98] sm:$0xff]
    %v115 = vld [vmem:[#allocation5 + $0xa0] sm:$0xff]
    %v116 = vld [vmem:[#allocation5 + $0xa8] sm:$0xff]
    %v117 = vld [vmem:[#allocation5 + $0xb0] sm:$0xff]
    %v118 = vld [vmem:[#allocation5 + $0xb8] sm:$0xff]
    %v119 = vld [vmem:[#allocation5 + $0xc0] sm:$0xff]
    %v120 = vld [vmem:[#allocation5 + $0xc8] sm:$0xff]
    %v121 = vld [vmem:[#allocation5 + $0xd0] sm:$0xff]
    %v122 = vld [vmem:[#allocation5 + $0xd8] sm:$0xff]
    %v123 = vld [vmem:[#allocation5 + $0xe0] sm:$0xff]
    %v124 = vld [vmem:[#allocation5 + $0xe8] sm:$0xff]
    %v125 = vld [vmem:[#allocation5 + $0xf0] sm:$0xff]
    %v126 = vld [vmem:[#allocation5 + $0xf8] sm:$0xff]
    %v127 = vld [vmem:[#allocation5 + $0x100] sm:$0xff]
    %v128 = vld [vmem:[#allocation5 + $0x108] sm:$0xff]
    %v129 = vld [vmem:[#allocation5 + $0x110] sm:$0xff]
    %v130 = vld [vmem:[#allocation5 + $0x118] sm:$0xff]
    %v131 = vld [vmem:[#allocation5 + $0x120] sm:$0xff]
    %v132 = vld [vmem:[#allocation5 + $0x128] sm:$0xff]
    %v133 = vld [vmem:[#allocation5 + $0x130] sm:$0xff]
    %v134 = vld [vmem:[#allocation5 + $0x138] sm:$0xff]
    %v135 = vld [vmem:[#allocation5 + $0x140] sm:$0xff]
    %v136 = vld [vmem:[#allocation5 + $0x148] sm:$0xff]
    %v137 = vld [vmem:[#allocation5 + $0x150] sm:$0xff]
    %v138 = vld [vmem:[#allocation5 + $0x158] sm:$0xff]
    %v139 = vld [vmem:[#allocation5 + $0x160] sm:$0xff]
    %v140 = vld [vmem:[#allocation5 + $0x168] sm:$0xff]
    %v141 = vld [vmem:[#allocation5 + $0x170] sm:$0xff]
    %v142 = vld [vmem:[#allocation5 + $0x178] sm:$0xff]
    %v143 = vld [vmem:[#allocation5 + $0x180] sm:$0xff]
    %v144 = vld [vmem:[#allocation5 + $0x188] sm:$0xff]
    %v145 = vld [vmem:[#allocation5 + $0x190] sm:$0xff]
    %v146 = vld [vmem:[#allocation5 + $0x198] sm:$0xff]
    %v147 = vld [vmem:[#allocation5 + $0x1a0] sm:$0xff]
    %v148 = vld [vmem:[#allocation5 + $0x1a8] sm:$0xff]
    %v149 = vld [vmem:[#allocation5 + $0x1b0] sm:$0xff]
    %v150 = vld [vmem:[#allocation5 + $0x1b8] sm:$0xff]
    %v151 = vld [vmem:[#allocation5 + $0x1c0] sm:$0xff]
    %v152 = vld [vmem:[#allocation5 + $0x1c8] sm:$0xff]
    %v153 = vld [vmem:[#allocation5 + $0x1d0] sm:$0xff]
    %v154 = vld [vmem:[#allocation5 + $0x1d8] sm:$0xff]
    %v155 = vld [vmem:[#allocation5 + $0x1e0] sm:$0xff]
    %v156 = vld [vmem:[#allocation5 + $0x1e8] sm:$0xff]
    %v157 = vld [vmem:[#allocation5 + $0x1f0] sm:$0xff]
    %v158 = vld [vmem:[#allocation5 + $0x1f8] sm:$0xff]
    %v159 = vld [vmem:[#allocation5 + $0x200] sm:$0xff]
    %v160 = vld [vmem:[#allocation5 + $0x208] sm:$0xff]
    %v161 = vld [vmem:[#allocation5 + $0x210] sm:$0xff]
    %v162 = vld [vmem:[#allocation5 + $0x218] sm:$0xff]
    %v163 = vld [vmem:[#allocation5 + $0x220] sm:$0xff]
    %v164 = vld [vmem:[#allocation5 + $0x228] sm:$0xff]
    %v165 = vld [vmem:[#allocation5 + $0x230] sm:$0xff]
    %v166 = vld [vmem:[#allocation5 + $0x238] sm:$0xff]
    %v167 = vld [vmem:[#allocation5 + $0x240] sm:$0xff]
    %v168 = vld [vmem:[#allocation5 + $0x248] sm:$0xff]
    %v169 = vld [vmem:[#allocation5 + $0x250] sm:$0xff]
    %v170 = vld [vmem:[#allocation5 + $0x258] sm:$0xff]
    %v171 = vld [vmem:[#allocation5 + $0x260] sm:$0xff]
    %v172 = vld [vmem:[#allocation5 + $0x268] sm:$0xff]
    %v173 = vld [vmem:[#allocation5 + $0x270] sm:$0xff]
    %v174 = vld [vmem:[#allocation5 + $0x278] sm:$0xff]
    %v175 = vld [vmem:[#allocation5 + $0x280] sm:$0xff]
    %v176 = vld [vmem:[#allocation5 + $0x288] sm:$0xff]
    %v177 = vld [vmem:[#allocation5 + $0x290] sm:$0xff]
    %v178 = vld [vmem:[#allocation5 + $0x298] sm:$0xff]
    %v179 = vld [vmem:[#allocation5 + $0x2a0] sm:$0xff]
    %v180 = vld [vmem:[#allocation5 + $0x2a8] sm:$0xff]
    %v181 = vld [vmem:[#allocation5 + $0x2b0] sm:$0xff]
    %v182 = vld [vmem:[#allocation5 + $0x2b8] sm:$0xff]
    %v183 = vld [vmem:[#allocation5 + $0x2c0] sm:$0xff]
    %v184 = vld [vmem:[#allocation5 + $0x2c8] sm:$0xff]
    %v185 = vld [vmem:[#allocation5 + $0x2d0] sm:$0xff]
    %v186 = vld [vmem:[#allocation5 + $0x2d8] sm:$0xff]
    %v187 = vld [vmem:[#allocation5 + $0x2e0] sm:$0xff]
    %v188 = vld [vmem:[#allocation5 + $0x2e8] sm:$0xff]
    %v189 = vld [vmem:[#allocation5 + $0x2f0] sm:$0xff]
    %v190 = vld [vmem:[#allocation5 + $0x2f8] sm:$0xff]
    %v191 = vld [vmem:[#allocation5 + $0x300] sm:$0xff]
    %v192 = vld [vmem:[#allocation5 + $0x308] sm:$0xff]
    %v193 = vld [vmem:[#allocation5 + $0x310] sm:$0xff]
    %v194 = vld [vmem:[#allocation5 + $0x318] sm:$0xff]
    %v195 = vld [vmem:[#allocation5 + $0x320] sm:$0xff]
    %v196 = vld [vmem:[#allocation5 + $0x328] sm:$0xff]
    %v197 = vld [vmem:[#allocation5 + $0x330] sm:$0xff]
    %v198 = vld [vmem:[#allocation5 + $0x338] sm:$0xff]
    %v199 = vld [vmem:[#allocation5 + $0x340] sm:$0xff]
    %v200 = vld [vmem:[#allocation5 + $0x348] sm:$0xff]
    %v201 = vld [vmem:[#allocation5 + $0x350] sm:$0xff]
    %v202 = vld [vmem:[#allocation5 + $0x358] sm:$0xff]
    %v203 = vld [vmem:[#allocation5 + $0x360] sm:$0xff]
    %v204 = vld [vmem:[#allocation5 + $0x368] sm:$0xff]
    %v205 = vld [vmem:[#allocation5 + $0x370] sm:$0xff]
    %v206 = vld [vmem:[#allocation5 + $0x378] sm:$0xff]
    %v207 = vld [vmem:[#allocation5 + $0x380] sm:$0xff]
    %v208 = vld [vmem:[#allocation5 + $0x388] sm:$0xff]
    %v209 = vld [vmem:[#allocation5 + $0x390] sm:$0xff]
    %v210 = vld [vmem:[#allocation5 + $0x398] sm:$0xff]
    %v211 = vld [vmem:[#allocation5 + $0x3a0] sm:$0xff]
    %v212 = vld [vmem:[#allocation5 + $0x3a8] sm:$0xff]
    %v213 = vld [vmem:[#allocation5 + $0x3b0] sm:$0xff]
    %v214 = vld [vmem:[#allocation5 + $0x3b8] sm:$0xff]
    %v215 = vld [vmem:[#allocation5 + $0x3c0] sm:$0xff]
    %v216 = vld [vmem:[#allocation5 + $0x3c8] sm:$0xff]
    %v217 = vld [vmem:[#allocation5 + $0x3d0] sm:$0xff]
    %v218 = vld [vmem:[#allocation5 + $0x3d8] sm:$0xff]
    %v219 = vld [vmem:[#allocation5 + $0x3e0] sm:$0xff]
    %v220 = vld [vmem:[#allocation5 + $0x3e8] sm:$0xff]
    %v221 = vld [vmem:[#allocation5 + $0x3f0] sm:$0xff]
    %v222 = vld [vmem:[#allocation5 + $0x3f8] sm:$0xff]
    %v223 = vld [vmem:[%s3] sm:$0xf]
    %v225 = vlaneseq
    %v226 = vshrl.u32 %v225, 7
    %v227 = vsub.s32 0, %v226
    %v228 = vrot.slane %v223, %v227
    %v229 = vlaneseq
    %v230 = vshrl.u32 %v229, 7
    %v231 = vsub.s32 1, %v230
    %v232 = vrot.slane %v223, %v231
    %v233 = vlaneseq
    %v234 = vshrl.u32 %v233, 7
    %v235 = vsub.s32 2, %v234
    %v236 = vrot.slane %v223, %v235
    %v237 = vlaneseq
    %v238 = vshrl.u32 %v237, 7
    %v239 = vsub.s32 3, %v238
    %v240 = vrot.slane %v223, %v239
    %245 = vmatprep.subr.mxu0 %v96
    %246 = vmatpush1.msra.mxu0 %v95
    %247 = vmatprep.subr.mxu0 %v100
    %248 = vmatpush1.msra.mxu0 %v99
    %249 = vmatprep.subr.mxu0 %v104
    %250 = vmatpush1.msra.mxu0 %v103
    %251 = vmatprep.subr.mxu0 %v108
    %252 = vmatpush1.msra.mxu0 %v107
    %253 = vmatprep.subr.mxu0 %v112
    %254 = vmatpush1.msra.mxu0 %v111
    %255 = vmatprep.subr.mxu0 %v116
    %256 = vmatpush1.msra.mxu0 %v115
    %257 = vmatprep.subr.mxu0 %v120
    %258 = vmatpush1.msra.mxu0 %v119
    %259 = vmatprep.subr.mxu0 %v124
    %260 = vmatpush1.msra.mxu0 %v123
    %261 = vmatprep.subr.mxu0 %v128
    %262 = vmatpush1.msra.mxu0 %v127
    %263 = vmatprep.subr.mxu0 %v132
    %264 = vmatpush1.msra.mxu0 %v131
    %265 = vmatprep.subr.mxu0 %v136
    %266 = vmatpush1.msra.mxu0 %v135
    %267 = vmatprep.subr.mxu0 %v140
    %268 = vmatpush1.msra.mxu0 %v139
    %269 = vmatprep.subr.mxu0 %v144
    %270 = vmatpush1.msra.mxu0 %v143
    %271 = vmatprep.subr.mxu0 %v148
    %272 = vmatpush1.msra.mxu0 %v147
    %273 = vmatprep.subr.mxu0 %v152
    %274 = vmatpush1.msra.mxu0 %v151
    %275 = vmatprep.subr.mxu0 %v156
    %276 = vmatpush1.msra.mxu0 %v155
    %277 = vmatprep.subr.mxu0 %v160
    %278 = vmatpush1.msra.mxu0 %v159
    %279 = vmatprep.subr.mxu0 %v164
    %280 = vmatpush1.msra.mxu0 %v163
    %281 = vmatprep.subr.mxu0 %v168
    %282 = vmatpush1.msra.mxu0 %v167
    %283 = vmatprep.subr.mxu0 %v172
    %284 = vmatpush1.msra.mxu0 %v171
    %285 = vmatprep.subr.mxu0 %v176
    %286 = vmatpush1.msra.mxu0 %v175
    %287 = vmatprep.subr.mxu0 %v180
    %288 = vmatpush1.msra.mxu0 %v179
    %289 = vmatprep.subr.mxu0 %v184
    %290 = vmatpush1.msra.mxu0 %v183
    %291 = vmatprep.subr.mxu0 %v188
    %292 = vmatpush1.msra.mxu0 %v187
    %293 = vmatprep.subr.mxu0 %v192
    %294 = vmatpush1.msra.mxu0 %v191
    %295 = vmatprep.subr.mxu0 %v196
    %296 = vmatpush1.msra.mxu0 %v195
    %297 = vmatprep.subr.mxu0 %v200
    %298 = vmatpush1.msra.mxu0 %v199
    %299 = vmatprep.subr.mxu0 %v204
    %300 = vmatpush1.msra.mxu0 %v203
    %301 = vmatprep.subr.mxu0 %v208
    %302 = vmatpush1.msra.mxu0 %v207
    %303 = vmatprep.subr.mxu0 %v212
    %304 = vmatpush1.msra.mxu0 %v211
    %305 = vmatprep.subr.mxu0 %v216
    %306 = vmatpush1.msra.mxu0 %v215
    %307 = vmatprep.subr.mxu0 %v220
    %308 = vmatpush1.msra.mxu0 %v219
    %309 = vmatprep.mubr.f32.mxu0 %v80
    %310 = vmatmul.mubr.f32.gmra.mrb[0].mxu0 %v79
    %v311 = vpop.f32.mrb[0].mxu0
    %v312 = vadd.f32 %v228, %v311
    %v313 = vpop.f32.mrb[0].mxu0
    %v314 = vadd.f32 %v232, %v313
    %315 = vmatprep.mubr.f32.mxu0 %v82
    %316 = vmatmul.mubr.f32.gmra.mrb[0].mxu0 %v81
    %v317 = vpop.f32.mrb[0].mxu0
    %v318 = vadd.f32 %v228, %v317
    %v319 = vpop.f32.mrb[0].mxu0
    %v320 = vadd.f32 %v232, %v319
    %321 = vmatprep.mubr.f32.mxu0 %v84
    %322 = vmatmul.mubr.f32.gmra.mrb[0].mxu0 %v83
    %v323 = vpop.f32.mrb[0].mxu0
    %v324 = vadd.f32 %v228, %v323
    %v325 = vpop.f32.mrb[0].mxu0
    %v326 = vadd.f32 %v232, %v325
    %327 = vmatprep.mubr.f32.mxu0 %v86
    %328 = vmatmul.mubr.f32.gmra.mrb[0].mxu0 %v85
    %v329 = vpop.f32.mrb[0].mxu0
    %v330 = vadd.f32 %v228, %v329
    %v331 = vpop.f32.mrb[0].mxu0
    %v332 = vadd.f32 %v232, %v331
    %333 = vmatprep.mubr.f32.mxu0 %v88
    %334 = vmatmul.mubr.f32.gmra.mrb[0].mxu0 %v87
    %v335 = vpop.f32.mrb[0].mxu0
    %v336 = vadd.f32 %v228, %v335
    %v337 = vpop.f32.mrb[0].mxu0
    %v338 = vadd.f32 %v232, %v337
    %339 = vmatprep.mubr.f32.mxu0 %v90
    %340 = vmatmul.mubr.f32.gmra.mrb[0].mxu0 %v89
    %v341 = vpop.f32.mrb[0].mxu0
    %v342 = vadd.f32 %v228, %v341
    %v343 = vpop.f32.mrb[0].mxu0
    %v344 = vadd.f32 %v232, %v343
    %345 = vmatprep.mubr.f32.mxu0 %v92
    %346 = vmatmul.mubr.f32.gmra.mrb[0].mxu0 %v91
    %v347 = vpop.f32.mrb[0].mxu0
    %v348 = vadd.f32 %v228, %v347
    %v349 = vpop.f32.mrb[0].mxu0
    %v350 = vadd.f32 %v232, %v349
    %351 = vmatprep.mubr.f32.mxu0 %v94
    %352 = vmatmul.mubr.f32.gmra.mrb[0].mxu0 %v93
    %v353 = vpop.f32.mrb[0].mxu0
    %v354 = vadd.f32 %v228, %v353
    %v355 = vpop.f32.mrb[0].mxu0
    %v356 = vadd.f32 %v232, %v355
    %357 = vdwg.mxu0
    %358 = vmatprep.subr.mxu0 %v98
    %359 = vmatpush1.msra.mxu0 %v97
    %360 = vmatprep.subr.mxu0 %v102
    %361 = vmatpush1.msra.mxu0 %v101
    %362 = vmatprep.subr.mxu0 %v106
    %363 = vmatpush1.msra.mxu0 %v105
    %364 = vmatprep.subr.mxu0 %v110
    %365 = vmatpush1.msra.mxu0 %v109
    %366 = vmatprep.subr.mxu0 %v114
    %367 = vmatpush1.msra.mxu0 %v113
    %368 = vmatprep.subr.mxu0 %v118
    %369 = vmatpush1.msra.mxu0 %v117
    %370 = vmatprep.subr.mxu0 %v122
    %371 = vmatpush1.msra.mxu0 %v121
    %372 = vmatprep.subr.mxu0 %v126
    %373 = vmatpush1.msra.mxu0 %v125
    %374 = vmatprep.subr.mxu0 %v130
    %375 = vmatpush1.msra.mxu0 %v129
    %376 = vmatprep.subr.mxu0 %v134
    %377 = vmatpush1.msra.mxu0 %v133
    %378 = vmatprep.subr.mxu0 %v138
    %379 = vmatpush1.msra.mxu0 %v137
    %380 = vmatprep.subr.mxu0 %v142
    %381 = vmatpush1.msra.mxu0 %v141
    %382 = vmatprep.subr.mxu0 %v146
    %383 = vmatpush1.msra.mxu0 %v145
    %384 = vmatprep.subr.mxu0 %v150
    %385 = vmatpush1.msra.mxu0 %v149
    %386 = vmatprep.subr.mxu0 %v154
    %387 = vmatpush1.msra.mxu0 %v153
    %388 = vmatprep.subr.mxu0 %v158
    %389 = vmatpush1.msra.mxu0 %v157
    %390 = vmatprep.subr.mxu0 %v162
    %391 = vmatpush1.msra.mxu0 %v161
    %392 = vmatprep.subr.mxu0 %v166
    %393 = vmatpush1.msra.mxu0 %v165
    %394 = vmatprep.subr.mxu0 %v170
    %395 = vmatpush1.msra.mxu0 %v169
    %396 = vmatprep.subr.mxu0 %v174
    %397 = vmatpush1.msra.mxu0 %v173
    %398 = vmatprep.subr.mxu0 %v178
    %399 = vmatpush1.msra.mxu0 %v177
    %400 = vmatprep.subr.mxu0 %v182
    %401 = vmatpush1.msra.mxu0 %v181
    %402 = vmatprep.subr.mxu0 %v186
    %403 = vmatpush1.msra.mxu0 %v185
    %404 = vmatprep.subr.mxu0 %v190
    %405 = vmatpush1.msra.mxu0 %v189
    %406 = vmatprep.subr.mxu0 %v194
    %407 = vmatpush1.msra.mxu0 %v193
    %408 = vmatprep.subr.mxu0 %v198
    %409 = vmatpush1.msra.mxu0 %v197
    %410 = vmatprep.subr.mxu0 %v202
    %411 = vmatpush1.msra.mxu0 %v201
    %412 = vmatprep.subr.mxu0 %v206
    %413 = vmatpush1.msra.mxu0 %v205
    %414 = vmatprep.subr.mxu0 %v210
    %415 = vmatpush1.msra.mxu0 %v209
    %416 = vmatprep.subr.mxu0 %v214
    %417 = vmatpush1.msra.mxu0 %v213
    %418 = vmatprep.subr.mxu0 %v218
    %419 = vmatpush1.msra.mxu0 %v217
    %420 = vmatprep.subr.mxu0 %v222
    %421 = vmatpush1.msra.mxu0 %v221
    %422 = vmatprep.mubr.f32.mxu0 %v80
    %423 = vmatmul.mubr.f32.gmra.mrb[0].mxu0 %v79
    %v424 = vpop.f32.mrb[0].mxu0
    %v425 = vadd.f32 %v236, %v424
    %v426 = vpop.f32.mrb[0].mxu0
    %v427 = vadd.f32 %v240, %v426
    %428 = vmatprep.mubr.f32.mxu0 %v82
    %429 = vmatmul.mubr.f32.gmra.mrb[0].mxu0 %v81
    %v430 = vpop.f32.mrb[0].mxu0
    %v431 = vadd.f32 %v236, %v430
    %v432 = vpop.f32.mrb[0].mxu0
    %v433 = vadd.f32 %v240, %v432
    %434 = vmatprep.mubr.f32.mxu0 %v84
    %435 = vmatmul.mubr.f32.gmra.mrb[0].mxu0 %v83
    %v436 = vpop.f32.mrb[0].mxu0
    %v437 = vadd.f32 %v236, %v436
    %v438 = vpop.f32.mrb[0].mxu0
    %v439 = vadd.f32 %v240, %v438
    %440 = vmatprep.mubr.f32.mxu0 %v86
    %441 = vmatmul.mubr.f32.gmra.mrb[0].mxu0 %v85
    %v442 = vpop.f32.mrb[0].mxu0
    %v443 = vadd.f32 %v236, %v442
    %v444 = vpop.f32.mrb[0].mxu0
    %v445 = vadd.f32 %v240, %v444
    %446 = vmatprep.mubr.f32.mxu0 %v88
    %447 = vmatmul.mubr.f32.gmra.mrb[0].mxu0 %v87
    %v448 = vpop.f32.mrb[0].mxu0
    %v449 = vadd.f32 %v236, %v448
    %v450 = vpop.f32.mrb[0].mxu0
    %v451 = vadd.f32 %v240, %v450
    %452 = vmatprep.mubr.f32.mxu0 %v90
    %453 = vmatmul.mubr.f32.gmra.mrb[0].mxu0 %v89
    %v454 = vpop.f32.mrb[0].mxu0
    %v455 = vadd.f32 %v236, %v454
    %v456 = vpop.f32.mrb[0].mxu0
    %v457 = vadd.f32 %v240, %v456
    %458 = vmatprep.mubr.f32.mxu0 %v92
    %459 = vmatmul.mubr.f32.gmra.mrb[0].mxu0 %v91
    %v460 = vpop.f32.mrb[0].mxu0
    %v461 = vadd.f32 %v236, %v460
    %v462 = vpop.f32.mrb[0].mxu0
    %v463 = vadd.f32 %v240, %v462
    %464 = vmatprep.mubr.f32.mxu0 %v94
    %465 = vmatmul.mubr.f32.gmra.mrb[0].mxu0 %v93
    %v466 = vpop.f32.mrb[0].mxu0
    %v467 = vadd.f32 %v236, %v466
    %v468 = vpop.f32.mrb[0].mxu0
    %v469 = vadd.f32 %v240, %v468
    %470 = vdwg.mxu0
    %v471 = vld [vmem:[#allocation7] sm:$0xff]
    %v472 = vld [vmem:[#allocation7 + $0x8] sm:$0xff]
    %v473 = vld [vmem:[#allocation7 + $0x10] sm:$0xff]
    %v474 = vld [vmem:[#allocation7 + $0x18] sm:$0xff]
    %v475 = vld [vmem:[#allocation7 + $0x20] sm:$0xff]
    %v476 = vld [vmem:[#allocation7 + $0x28] sm:$0xff]
    %v477 = vld [vmem:[#allocation7 + $0x30] sm:$0xff]
    %v478 = vld [vmem:[#allocation7 + $0x38] sm:$0xff]
    %v479 = vld [vmem:[#allocation7 + $0x40] sm:$0xff]
    %v480 = vld [vmem:[#allocation7 + $0x48] sm:$0xff]
    %v481 = vld [vmem:[#allocation7 + $0x50] sm:$0xff]
    %v482 = vld [vmem:[#allocation7 + $0x58] sm:$0xff]
    %v483 = vld [vmem:[#allocation7 + $0x60] sm:$0xff]
    %v484 = vld [vmem:[#allocation7 + $0x68] sm:$0xff]
    %v485 = vld [vmem:[#allocation7 + $0x70] sm:$0xff]
    %v486 = vld [vmem:[#allocation7 + $0x78] sm:$0xff]
    %v487 = vld [vmem:[#allocation7 + $0x80] sm:$0xff]
    %v488 = vld [vmem:[#allocation7 + $0x88] sm:$0xff]
    %v489 = vld [vmem:[#allocation7 + $0x90] sm:$0xff]
    %v490 = vld [vmem:[#allocation7 + $0x98] sm:$0xff]
    %v491 = vld [vmem:[#allocation7 + $0xa0] sm:$0xff]
    %v492 = vld [vmem:[#allocation7 + $0xa8] sm:$0xff]
    %v493 = vld [vmem:[#allocation7 + $0xb0] sm:$0xff]
    %v494 = vld [vmem:[#allocation7 + $0xb8] sm:$0xff]
    %v495 = vld [vmem:[#allocation7 + $0xc0] sm:$0xff]
    %v496 = vld [vmem:[#allocation7 + $0xc8] sm:$0xff]
    %v497 = vld [vmem:[#allocation7 + $0xd0] sm:$0xff]
    %v498 = vld [vmem:[#allocation7 + $0xd8] sm:$0xff]
    %v499 = vld [vmem:[#allocation7 + $0xe0] sm:$0xff]
    %v500 = vld [vmem:[#allocation7 + $0xe8] sm:$0xff]
    %v501 = vld [vmem:[#allocation7 + $0xf0] sm:$0xff]
    %v502 = vld [vmem:[#allocation7 + $0xf8] sm:$0xff]
    %v503 = vld [vmem:[#allocation7 + $0x100] sm:$0xff]
    %v504 = vld [vmem:[#allocation7 + $0x108] sm:$0xff]
    %v505 = vld [vmem:[#allocation7 + $0x110] sm:$0xff]
    %v506 = vld [vmem:[#allocation7 + $0x118] sm:$0xff]
    %v507 = vld [vmem:[#allocation7 + $0x120] sm:$0xff]
    %v508 = vld [vmem:[#allocation7 + $0x128] sm:$0xff]
    %v509 = vld [vmem:[#allocation7 + $0x130] sm:$0xff]
    %v510 = vld [vmem:[#allocation7 + $0x138] sm:$0xff]
    %v511 = vld [vmem:[#allocation7 + $0x140] sm:$0xff]
    %v512 = vld [vmem:[#allocation7 + $0x148] sm:$0xff]
    %v513 = vld [vmem:[#allocation7 + $0x150] sm:$0xff]
    %v514 = vld [vmem:[#allocation7 + $0x158] sm:$0xff]
    %v515 = vld [vmem:[#allocation7 + $0x160] sm:$0xff]
    %v516 = vld [vmem:[#allocation7 + $0x168] sm:$0xff]
    %v517 = vld [vmem:[#allocation7 + $0x170] sm:$0xff]
    %v518 = vld [vmem:[#allocation7 + $0x178] sm:$0xff]
    %v519 = vld [vmem:[#allocation7 + $0x180] sm:$0xff]
    %v520 = vld [vmem:[#allocation7 + $0x188] sm:$0xff]
    %v521 = vld [vmem:[#allocation7 + $0x190] sm:$0xff]
    %v522 = vld [vmem:[#allocation7 + $0x198] sm:$0xff]
    %v523 = vld [vmem:[#allocation7 + $0x1a0] sm:$0xff]
    %v524 = vld [vmem:[#allocation7 + $0x1a8] sm:$0xff]
    %v525 = vld [vmem:[#allocation7 + $0x1b0] sm:$0xff]
    %v526 = vld [vmem:[#allocation7 + $0x1b8] sm:$0xff]
    %v527 = vld [vmem:[#allocation7 + $0x1c0] sm:$0xff]
    %v528 = vld [vmem:[#allocation7 + $0x1c8] sm:$0xff]
    %v529 = vld [vmem:[#allocation7 + $0x1d0] sm:$0xff]
    %v530 = vld [vmem:[#allocation7 + $0x1d8] sm:$0xff]
    %v531 = vld [vmem:[#allocation7 + $0x1e0] sm:$0xff]
    %v532 = vld [vmem:[#allocation7 + $0x1e8] sm:$0xff]
    %v533 = vld [vmem:[#allocation7 + $0x1f0] sm:$0xff]
    %v534 = vld [vmem:[#allocation7 + $0x1f8] sm:$0xff]
    %535 = vmatprep.subr.mxu0 %v472
    %536 = vmatpush1.msra.mxu0 %v471
    %537 = vmatprep.subr.mxu0 %v476
    %538 = vmatpush1.msra.mxu0 %v475
    %539 = vmatprep.subr.mxu0 %v480
    %540 = vmatpush1.msra.mxu0 %v479
    %541 = vmatprep.subr.mxu0 %v484
    %542 = vmatpush1.msra.mxu0 %v483
    %543 = vmatprep.subr.mxu0 %v488
    %544 = vmatpush1.msra.mxu0 %v487
    %545 = vmatprep.subr.mxu0 %v492
    %546 = vmatpush1.msra.mxu0 %v491
    %547 = vmatprep.subr.mxu0 %v496
    %548 = vmatpush1.msra.mxu0 %v495
    %549 = vmatprep.subr.mxu0 %v500
    %550 = vmatpush1.msra.mxu0 %v499
    %551 = vmatprep.subr.mxu0 %v504
    %552 = vmatpush1.msra.mxu0 %v503
    %553 = vmatprep.subr.mxu0 %v508
    %554 = vmatpush1.msra.mxu0 %v507
    %555 = vmatprep.subr.mxu0 %v512
    %556 = vmatpush1.msra.mxu0 %v511
    %557 = vmatprep.subr.mxu0 %v516
    %558 = vmatpush1.msra.mxu0 %v515
    %559 = vmatprep.subr.mxu0 %v520
    %560 = vmatpush1.msra.mxu0 %v519
    %561 = vmatprep.subr.mxu0 %v524
    %562 = vmatpush1.msra.mxu0 %v523
    %563 = vmatprep.subr.mxu0 %v528
    %564 = vmatpush1.msra.mxu0 %v527
    %565 = vmatprep.subr.mxu0 %v532
    %566 = vmatpush1.msra.mxu0 %v531
    %567 = vmatprep.subr.mxu0 0.0
    %568 = vmatpush1.msra.mxu0 0.0
    %569 = vmatprep.subr.mxu0 0.0
    %570 = vmatpush1.msra.mxu0 0.0
    %571 = vmatprep.subr.mxu0 0.0
    %572 = vmatpush1.msra.mxu0 0.0
    %573 = vmatprep.subr.mxu0 0.0
    %574 = vmatpush1.msra.mxu0 0.0
    %575 = vmatprep.subr.mxu0 0.0
    %576 = vmatpush1.msra.mxu0 0.0
    %577 = vmatprep.subr.mxu0 0.0
    %578 = vmatpush1.msra.mxu0 0.0
    %579 = vmatprep.subr.mxu0 0.0
    %580 = vmatpush1.msra.mxu0 0.0
    %581 = vmatprep.subr.mxu0 0.0
    %582 = vmatpush1.msra.mxu0 0.0
    %583 = vmatprep.subr.mxu0 0.0
    %584 = vmatpush1.msra.mxu0 0.0
    %585 = vmatprep.subr.mxu0 0.0
    %586 = vmatpush1.msra.mxu0 0.0
    %587 = vmatprep.subr.mxu0 0.0
    %588 = vmatpush1.msra.mxu0 0.0
    %589 = vmatprep.subr.mxu0 0.0
    %590 = vmatpush1.msra.mxu0 0.0
    %591 = vmatprep.subr.mxu0 0.0
    %592 = vmatpush1.msra.mxu0 0.0
    %593 = vmatprep.subr.mxu0 0.0
    %594 = vmatpush1.msra.mxu0 0.0
    %595 = vmatprep.subr.mxu0 0.0
    %596 = vmatpush1.msra.mxu0 0.0
    %597 = vmatprep.subr.mxu0 0.0
    %598 = vmatpush1.msra.mxu0 0.0
    %599 = vmatprep.mubr.f32.mxu0 0.0
    %600 = vmatmul.mubr.f32.gmra.mrb[0].mxu0 0.0
    %v601 = vpop.f32.mrb[0].mxu0
    %v602 = vadd.f32 0.0, %v601
    %v603 = vpop.f32.mrb[0].mxu0
    %v604 = vadd.f32 0.0, %v603
    %605 = vdwg.mxu0
    %606 = vmatprep.subr.mxu0 %v474
    %607 = vmatpush1.msra.mxu0 %v473
    %608 = vmatprep.subr.mxu0 %v478
    %609 = vmatpush1.msra.mxu0 %v477
    %610 = vmatprep.subr.mxu0 %v482
    %611 = vmatpush1.msra.mxu0 %v481
    %612 = vmatprep.subr.mxu0 %v486
    %613 = vmatpush1.msra.mxu0 %v485
    %614 = vmatprep.subr.mxu0 %v490
    %615 = vmatpush1.msra.mxu0 %v489
    %616 = vmatprep.subr.mxu0 %v494
    %617 = vmatpush1.msra.mxu0 %v493
    %618 = vmatprep.subr.mxu0 %v498
    %619 = vmatpush1.msra.mxu0 %v497
    %620 = vmatprep.subr.mxu0 %v502
    %621 = vmatpush1.msra.mxu0 %v501
    %622 = vmatprep.subr.mxu0 %v506
    %623 = vmatpush1.msra.mxu0 %v505
    %624 = vmatprep.subr.mxu0 %v510
    %625 = vmatpush1.msra.mxu0 %v509
    %626 = vmatprep.subr.mxu0 %v514
    %627 = vmatpush1.msra.mxu0 %v513
    %628 = vmatprep.subr.mxu0 %v518
    %629 = vmatpush1.msra.mxu0 %v517
    %630 = vmatprep.subr.mxu0 %v522
    %631 = vmatpush1.msra.mxu0 %v521
    %632 = vmatprep.subr.mxu0 %v526
    %633 = vmatpush1.msra.mxu0 %v525
    %634 = vmatprep.subr.mxu0 %v530
    %635 = vmatpush1.msra.mxu0 %v529
    %636 = vmatprep.subr.mxu0 %v534
    %637 = vmatpush1.msra.mxu0 %v533
    %638 = vmatprep.subr.mxu0 0.0
    %639 = vmatpush1.msra.mxu0 0.0
    %640 = vmatprep.subr.mxu0 0.0
    %641 = vmatpush1.msra.mxu0 0.0
    %642 = vmatprep.subr.mxu0 0.0
    %643 = vmatpush1.msra.mxu0 0.0
    %644 = vmatprep.subr.mxu0 0.0
    %645 = vmatpush1.msra.mxu0 0.0
    %646 = vmatprep.subr.mxu0 0.0
    %647 = vmatpush1.msra.mxu0 0.0
    %648 = vmatprep.subr.mxu0 0.0
    %649 = vmatpush1.msra.mxu0 0.0
    %650 = vmatprep.subr.mxu0 0.0
    %651 = vmatpush1.msra.mxu0 0.0
    %652 = vmatprep.subr.mxu0 0.0
    %653 = vmatpush1.msra.mxu0 0.0
    %654 = vmatprep.subr.mxu0 0.0
    %655 = vmatpush1.msra.mxu0 0.0
    %656 = vmatprep.subr.mxu0 0.0
    %657 = vmatpush1.msra.mxu0 0.0
    %658 = vmatprep.subr.mxu0 0.0
    %659 = vmatpush1.msra.mxu0 0.0
    %660 = vmatprep.subr.mxu0 0.0
    %661 = vmatpush1.msra.mxu0 0.0
    %662 = vmatprep.subr.mxu0 0.0
    %663 = vmatpush1.msra.mxu0 0.0
    %664 = vmatprep.subr.mxu0 0.0
    %665 = vmatpush1.msra.mxu0 0.0
    %666 = vmatprep.subr.mxu0 0.0
    %667 = vmatpush1.msra.mxu0 0.0
    %668 = vmatprep.subr.mxu0 0.0
    %669 = vmatpush1.msra.mxu0 0.0
    %670 = vmatprep.mubr.f32.mxu0 0.0
    %671 = vmatmul.mubr.f32.gmra.mrb[0].mxu0 0.0
    %v672 = vpop.f32.mrb[0].mxu0
    %v673 = vadd.f32 0.0, %v672
    %v674 = vpop.f32.mrb[0].mxu0
    %v675 = vadd.f32 0.0, %v674
    %676 = vdwg.mxu0
    %v677 = vadd.f32 %v312, %v602
    %v678 = vadd.f32 %v314, %v604
    %v679 = vadd.f32 %v425, %v673
    %v680 = vadd.f32 %v427, %v675
    %v681 = vxor.u32 %v677, 2147483648
    %v682 = vmul.f32 %v681, 1.442695
    %v683 = vpow.pop %v682
    %v684 = vadd.f32 %v683, 1.0
    %v685 = vrcp.pop %v684
    %v686 = vmul.f32 1.0, %v685
    %v687 = vxor.u32 %v678, 2147483648
    %v688 = vmul.f32 %v687, 1.442695
    %v689 = vpow.pop %v688
    %v690 = vadd.f32 %v689, 1.0
    %v691 = vrcp.pop %v690
    %v692 = vmul.f32 1.0, %v691
    %v693 = vtanh.pop %v679
    %v694 = vxor.u32 %v680, 2147483648
    %v695 = vmul.f32 %v694, 1.442695
    %v696 = vpow.pop %v695
    %v697 = vadd.f32 %v696, 1.0
    %v698 = vrcp.pop %v697
    %v699 = vmul.f32 1.0, %v698
    %v700 = vmul.f32 %v692, 0.0
    %v701 = vmul.f32 %v686, %v693
    %v702 = vadd.f32 %v700, %v701
    %v703 = vtanh.pop %v702
    %v704 = vmul.f32 %v699, %v703
    %705 = vmatprep.subr.mxu0 %v472
    %706 = vmatpush1.msra.mxu0 %v471
    %707 = vmatprep.subr.mxu0 %v476
    %708 = vmatpush1.msra.mxu0 %v475
    %709 = vmatprep.subr.mxu0 %v480
    %710 = vmatpush1.msra.mxu0 %v479
    %711 = vmatprep.subr.mxu0 %v484
    %712 = vmatpush1.msra.mxu0 %v483
    %713 = vmatprep.subr.mxu0 %v488
    %714 = vmatpush1.msra.mxu0 %v487
    %715 = vmatprep.subr.mxu0 %v492
    %716 = vmatpush1.msra.mxu0 %v491
    %717 = vmatprep.subr.mxu0 %v496
    %718 = vmatpush1.msra.mxu0 %v495
    %719 = vmatprep.subr.mxu0 %v500
    %720 = vmatpush1.msra.mxu0 %v499
    %721 = vmatprep.subr.mxu0 %v504
    %722 = vmatpush1.msra.mxu0 %v503
    %723 = vmatprep.subr.mxu0 %v508
    %724 = vmatpush1.msra.mxu0 %v507
    %725 = vmatprep.subr.mxu0 %v512
    %726 = vmatpush1.msra.mxu0 %v511
    %727 = vmatprep.subr.mxu0 %v516
    %728 = vmatpush1.msra.mxu0 %v515
    %729 = vmatprep.subr.mxu0 %v520
    %730 = vmatpush1.msra.mxu0 %v519
    %731 = vmatprep.subr.mxu0 %v524
    %732 = vmatpush1.msra.mxu0 %v523
    %733 = vmatprep.subr.mxu0 %v528
    %734 = vmatpush1.msra.mxu0 %v527
    %735 = vmatprep.subr.mxu0 %v532
    %736 = vmatpush1.msra.mxu0 %v531
    %737 = vmatprep.subr.mxu0 0.0
    %738 = vmatpush1.msra.mxu0 0.0
    %739 = vmatprep.subr.mxu0 0.0
    %740 = vmatpush1.msra.mxu0 0.0
    %741 = vmatprep.subr.mxu0 0.0
    %742 = vmatpush1.msra.mxu0 0.0
    %743 = vmatprep.subr.mxu0 0.0
    %744 = vmatpush1.msra.mxu0 0.0
    %745 = vmatprep.subr.mxu0 0.0
    %746 = vmatpush1.msra.mxu0 0.0
    %747 = vmatprep.subr.mxu0 0.0
    %748 = vmatpush1.msra.mxu0 0.0
    %749 = vmatprep.subr.mxu0 0.0
    %750 = vmatpush1.msra.mxu0 0.0
    %751 = vmatprep.subr.mxu0 0.0
    %752 = vmatpush1.msra.mxu0 0.0
    %753 = vmatprep.subr.mxu0 0.0
    %754 = vmatpush1.msra.mxu0 0.0
    %755 = vmatprep.subr.mxu0 0.0
    %756 = vmatpush1.msra.mxu0 0.0
    %757 = vmatprep.subr.mxu0 0.0
    %758 = vmatpush1.msra.mxu0 0.0
    %759 = vmatprep.subr.mxu0 0.0
    %760 = vmatpush1.msra.mxu0 0.0
    %761 = vmatprep.subr.mxu0 0.0
    %762 = vmatpush1.msra.mxu0 0.0
    %763 = vmatprep.subr.mxu0 0.0
    %764 = vmatpush1.msra.mxu0 0.0
    %765 = vmatprep.subr.mxu0 0.0
    %766 = vmatpush1.msra.mxu0 0.0
    %767 = vmatprep.subr.mxu0 0.0
    %768 = vmatpush1.msra.mxu0 0.0
    %769 = vmatprep.mubr.f32.mxu0 0.0
    %770 = vmatmul.mubr.f32.gmra.mrb[0].mxu0 %v704
    %v771 = vpop.f32.mrb[0].mxu0
    %v772 = vadd.f32 0.0, %v771
    %v773 = vpop.f32.mrb[0].mxu0
    %v774 = vadd.f32 0.0, %v773
    %775 = vdwg.mxu0
    %776 = vmatprep.subr.mxu0 %v474
    %777 = vmatpush1.msra.mxu0 %v473
    %778 = vmatprep.subr.mxu0 %v478
    %779 = vmatpush1.msra.mxu0 %v477
    %780 = vmatprep.subr.mxu0 %v482
    %781 = vmatpush1.msra.mxu0 %v481
    %782 = vmatprep.subr.mxu0 %v486
    %783 = vmatpush1.msra.mxu0 %v485
    %784 = vmatprep.subr.mxu0 %v490
    %785 = vmatpush1.msra.mxu0 %v489
    %786 = vmatprep.subr.mxu0 %v494
    %787 = vmatpush1.msra.mxu0 %v493
    %788 = vmatprep.subr.mxu0 %v498
    %789 = vmatpush1.msra.mxu0 %v497
    %790 = vmatprep.subr.mxu0 %v502
    %791 = vmatpush1.msra.mxu0 %v501
    %792 = vmatprep.subr.mxu0 %v506
    %793 = vmatpush1.msra.mxu0 %v505
    %794 = vmatprep.subr.mxu0 %v510
    %795 = vmatpush1.msra.mxu0 %v509
    %796 = vmatprep.subr.mxu0 %v514
    %797 = vmatpush1.msra.mxu0 %v513
    %798 = vmatprep.subr.mxu0 %v518
    %799 = vmatpush1.msra.mxu0 %v517
    %800 = vmatprep.subr.mxu0 %v522
    %801 = vmatpush1.msra.mxu0 %v521
    %802 = vmatprep.subr.mxu0 %v526
    %803 = vmatpush1.msra.mxu0 %v525
    %804 = vmatprep.subr.mxu0 %v530
    %805 = vmatpush1.msra.mxu0 %v529
    %806 = vmatprep.subr.mxu0 %v534
    %807 = vmatpush1.msra.mxu0 %v533
    %808 = vmatprep.subr.mxu0 0.0
    %809 = vmatpush1.msra.mxu0 0.0
    %810 = vmatprep.subr.mxu0 0.0
    %811 = vmatpush1.msra.mxu0 0.0
    %812 = vmatprep.subr.mxu0 0.0
    %813 = vmatpush1.msra.mxu0 0.0
    %814 = vmatprep.subr.mxu0 0.0
    %815 = vmatpush1.msra.mxu0 0.0
    %816 = vmatprep.subr.mxu0 0.0
    %817 = vmatpush1.msra.mxu0 0.0
    %818 = vmatprep.subr.mxu0 0.0
    %819 = vmatpush1.msra.mxu0 0.0
    %820 = vmatprep.subr.mxu0 0.0
    %821 = vmatpush1.msra.mxu0 0.0
    %822 = vmatprep.subr.mxu0 0.0
    %823 = vmatpush1.msra.mxu0 0.0
    %824 = vmatprep.subr.mxu0 0.0
    %825 = vmatpush1.msra.mxu0 0.0
    %826 = vmatprep.subr.mxu0 0.0
    %827 = vmatpush1.msra.mxu0 0.0
    %828 = vmatprep.subr.mxu0 0.0
    %829 = vmatpush1.msra.mxu0 0.0
    %830 = vmatprep.subr.mxu0 0.0
    %831 = vmatpush1.msra.mxu0 0.0
    %832 = vmatprep.subr.mxu0 0.0
    %833 = vmatpush1.msra.mxu0 0.0
    %834 = vmatprep.subr.mxu0 0.0
    %835 = vmatpush1.msra.mxu0 0.0
    %836 = vmatprep.subr.mxu0 0.0
    %837 = vmatpush1.msra.mxu0 0.0
    %838 = vmatprep.subr.mxu0 0.0
    %839 = vmatpush1.msra.mxu0 0.0
    %840 = vmatprep.mubr.f32.mxu0 0.0
    %841 = vmatmul.mubr.f32.gmra.mrb[0].mxu0 %v704
    %v842 = vpop.f32.mrb[0].mxu0
    %v843 = vadd.f32 0.0, %v842
    %v844 = vpop.f32.mrb[0].mxu0
    %v845 = vadd.f32 0.0, %v844
    %846 = vdwg.mxu0
    %v847 = vadd.f32 %v318, %v772
    %v848 = vadd.f32 %v320, %v774
    %v849 = vadd.f32 %v431, %v843
    %v850 = vadd.f32 %v433, %v845
    %v851 = vxor.u32 %v847, 2147483648
    %v852 = vmul.f32 %v851, 1.442695
    %v853 = vpow.pop %v852
    %v854 = vadd.f32 %v853, 1.0
    %v855 = vrcp.pop %v854
    %v856 = vmul.f32 1.0, %v855
    %v857 = vxor.u32 %v848, 2147483648
    %v858 = vmul.f32 %v857, 1.442695
    %v859 = vpow.pop %v858
    %v860 = vadd.f32 %v859, 1.0
    %v861 = vrcp.pop %v860
    %v862 = vmul.f32 1.0, %v861
    %v863 = vtanh.pop %v849
    %v864 = vxor.u32 %v850, 2147483648
    %v865 = vmul.f32 %v864, 1.442695
    %v866 = vpow.pop %v865
    %v867 = vadd.f32 %v866, 1.0
    %v868 = vrcp.pop %v867
    %v869 = vmul.f32 1.0, %v868
    %v870 = vmul.f32 %v862, %v702
    %v871 = vmul.f32 %v856, %v863
    %v872 = vadd.f32 %v870, %v871
    %v873 = vtanh.pop %v872
    %v874 = vmul.f32 %v869, %v873
    %875 = vmatprep.subr.mxu0 %v472
    %876 = vmatpush1.msra.mxu0 %v471
    %877 = vmatprep.subr.mxu0 %v476
    %878 = vmatpush1.msra.mxu0 %v475
    %879 = vmatprep.subr.mxu0 %v480
    %880 = vmatpush1.msra.mxu0 %v479
    %881 = vmatprep.subr.mxu0 %v484
    %882 = vmatpush1.msra.mxu0 %v483
    %883 = vmatprep.subr.mxu0 %v488
    %884 = vmatpush1.msra.mxu0 %v487
    %885 = vmatprep.subr.mxu0 %v492
    %886 = vmatpush1.msra.mxu0 %v491
    %887 = vmatprep.subr.mxu0 %v496
    %888 = vmatpush1.msra.mxu0 %v495
    %889 = vmatprep.subr.mxu0 %v500
    %890 = vmatpush1.msra.mxu0 %v499
    %891 = vmatprep.subr.mxu0 %v504
    %892 = vmatpush1.msra.mxu0 %v503
    %893 = vmatprep.subr.mxu0 %v508
    %894 = vmatpush1.msra.mxu0 %v507
    %895 = vmatprep.subr.mxu0 %v512
    %896 = vmatpush1.msra.mxu0 %v511
    %897 = vmatprep.subr.mxu0 %v516
    %898 = vmatpush1.msra.mxu0 %v515
    %899 = vmatprep.subr.mxu0 %v520
    %900 = vmatpush1.msra.mxu0 %v519
    %901 = vmatprep.subr.mxu0 %v524
    %902 = vmatpush1.msra.mxu0 %v523
    %903 = vmatprep.subr.mxu0 %v528
    %904 = vmatpush1.msra.mxu0 %v527
    %905 = vmatprep.subr.mxu0 %v532
    %906 = vmatpush1.msra.mxu0 %v531
    %907 = vmatprep.subr.mxu0 0.0
    %908 = vmatpush1.msra.mxu0 0.0
    %909 = vmatprep.subr.mxu0 0.0
    %910 = vmatpush1.msra.mxu0 0.0
    %911 = vmatprep.subr.mxu0 0.0
    %912 = vmatpush1.msra.mxu0 0.0
    %913 = vmatprep.subr.mxu0 0.0
    %914 = vmatpush1.msra.mxu0 0.0
    %915 = vmatprep.subr.mxu0 0.0
    %916 = vmatpush1.msra.mxu0 0.0
    %917 = vmatprep.subr.mxu0 0.0
    %918 = vmatpush1.msra.mxu0 0.0
    %919 = vmatprep.subr.mxu0 0.0
    %920 = vmatpush1.msra.mxu0 0.0
    %921 = vmatprep.subr.mxu0 0.0
    %922 = vmatpush1.msra.mxu0 0.0
    %923 = vmatprep.subr.mxu0 0.0
    %924 = vmatpush1.msra.mxu0 0.0
    %925 = vmatprep.subr.mxu0 0.0
    %926 = vmatpush1.msra.mxu0 0.0
    %927 = vmatprep.subr.mxu0 0.0
    %928 = vmatpush1.msra.mxu0 0.0
    %929 = vmatprep.subr.mxu0 0.0
    %930 = vmatpush1.msra.mxu0 0.0
    %931 = vmatprep.subr.mxu0 0.0
    %932 = vmatpush1.msra.mxu0 0.0
    %933 = vmatprep.subr.mxu0 0.0
    %934 = vmatpush1.msra.mxu0 0.0
    %935 = vmatprep.subr.mxu0 0.0
    %936 = vmatpush1.msra.mxu0 0.0
    %937 = vmatprep.subr.mxu0 0.0
    %938 = vmatpush1.msra.mxu0 0.0
    %939 = vmatprep.mubr.f32.mxu0 0.0
    %940 = vmatmul.mubr.f32.gmra.mrb[0].mxu0 %v874
    %v941 = vpop.f32.mrb[0].mxu0
    %v942 = vadd.f32 0.0, %v941
    %v943 = vpop.f32.mrb[0].mxu0
    %v944 = vadd.f32 0.0, %v943
    %945 = vdwg.mxu0
    %946 = vmatprep.subr.mxu0 %v474
    %947 = vmatpush1.msra.mxu0 %v473
    %948 = vmatprep.subr.mxu0 %v478
    %949 = vmatpush1.msra.mxu0 %v477
    %950 = vmatprep.subr.mxu0 %v482
    %951 = vmatpush1.msra.mxu0 %v481
    %952 = vmatprep.subr.mxu0 %v486
    %953 = vmatpush1.msra.mxu0 %v485
    %954 = vmatprep.subr.mxu0 %v490
    %955 = vmatpush1.msra.mxu0 %v489
    %956 = vmatprep.subr.mxu0 %v494
    %957 = vmatpush1.msra.mxu0 %v493
    %958 = vmatprep.subr.mxu0 %v498
    %959 = vmatpush1.msra.mxu0 %v497
    %960 = vmatprep.subr.mxu0 %v502
    %961 = vmatpush1.msra.mxu0 %v501
    %962 = vmatprep.subr.mxu0 %v506
    %963 = vmatpush1.msra.mxu0 %v505
    %964 = vmatprep.subr.mxu0 %v510
    %965 = vmatpush1.msra.mxu0 %v509
    %966 = vmatprep.subr.mxu0 %v514
    %967 = vmatpush1.msra.mxu0 %v513
    %968 = vmatprep.subr.mxu0 %v518
    %969 = vmatpush1.msra.mxu0 %v517
    %970 = vmatprep.subr.mxu0 %v522
    %971 = vmatpush1.msra.mxu0 %v521
    %972 = vmatprep.subr.mxu0 %v526
    %973 = vmatpush1.msra.mxu0 %v525
    %974 = vmatprep.subr.mxu0 %v530
    %975 = vmatpush1.msra.mxu0 %v529
    %976 = vmatprep.subr.mxu0 %v534
    %977 = vmatpush1.msra.mxu0 %v533
    %978 = vmatprep.subr.mxu0 0.0
    %979 = vmatpush1.msra.mxu0 0.0
    %980 = vmatprep.subr.mxu0 0.0
    %981 = vmatpush1.msra.mxu0 0.0
    %982 = vmatprep.subr.mxu0 0.0
    %983 = vmatpush1.msra.mxu0 0.0
    %984 = vmatprep.subr.mxu0 0.0
    %985 = vmatpush1.msra.mxu0 0.0
    %986 = vmatprep.subr.mxu0 0.0
    %987 = vmatpush1.msra.mxu0 0.0
    %988 = vmatprep.subr.mxu0 0.0
    %989 = vmatpush1.msra.mxu0 0.0
    %990 = vmatprep.subr.mxu0 0.0
    %991 = vmatpush1.msra.mxu0 0.0
    %992 = vmatprep.subr.mxu0 0.0
    %993 = vmatpush1.msra.mxu0 0.0
    %994 = vmatprep.subr.mxu0 0.0
    %995 = vmatpush1.msra.mxu0 0.0
    %996 = vmatprep.subr.mxu0 0.0
    %997 = vmatpush1.msra.mxu0 0.0
    %998 = vmatprep.subr.mxu0 0.0
    %999 = vmatpush1.msra.mxu0 0.0
    %1000 = vmatprep.subr.mxu0 0.0
    %1001 = vmatpush1.msra.mxu0 0.0
    %1002 = vmatprep.subr.mxu0 0.0
    %1003 = vmatpush1.msra.mxu0 0.0
    %1004 = vmatprep.subr.mxu0 0.0
    %1005 = vmatpush1.msra.mxu0 0.0
    %1006 = vmatprep.subr.mxu0 0.0
    %1007 = vmatpush1.msra.mxu0 0.0
    %1008 = vmatprep.subr.mxu0 0.0
    %1009 = vmatpush1.msra.mxu0 0.0
    %1010 = vmatprep.mubr.f32.mxu0 0.0
    %1011 = vmatmul.mubr.f32.gmra.mrb[0].mxu0 %v874
    %v1012 = vpop.f32.mrb[0].mxu0
    %v1013 = vadd.f32 0.0, %v1012
    %v1014 = vpop.f32.mrb[0].mxu0
    %v1015 = vadd.f32 0.0, %v1014
    %1016 = vdwg.mxu0
    %v1017 = vadd.f32 %v324, %v942
    %v1018 = vadd.f32 %v326, %v944
    %v1019 = vadd.f32 %v437, %v1013
    %v1020 = vadd.f32 %v439, %v1015
    %v1021 = vxor.u32 %v1017, 2147483648
    %v1022 = vmul.f32 %v1021, 1.442695
    %v1023 = vpow.pop %v1022
    %v1024 = vadd.f32 %v1023, 1.0
    %v1025 = vrcp.pop %v1024
    %v1026 = vmul.f32 1.0, %v1025
    %v1027 = vxor.u32 %v1018, 2147483648
    %v1028 = vmul.f32 %v1027, 1.442695
    %v1029 = vpow.pop %v1028
    %v1030 = vadd.f32 %v1029, 1.0
    %v1031 = vrcp.pop %v1030
    %v1032 = vmul.f32 1.0, %v1031
    %v1033 = vtanh.pop %v1019
    %v1034 = vxor.u32 %v1020, 2147483648
    %v1035 = vmul.f32 %v1034, 1.442695
    %v1036 = vpow.pop %v1035
    %v1037 = vadd.f32 %v1036, 1.0
    %v1038 = vrcp.pop %v1037
    %v1039 = vmul.f32 1.0, %v1038
    %v1040 = vmul.f32 %v1032, %v872
    %v1041 = vmul.f32 %v1026, %v1033
    %v1042 = vadd.f32 %v1040, %v1041
    %v1043 = vtanh.pop %v1042
    %v1044 = vmul.f32 %v1039, %v1043
    %1045 = vmatprep.subr.mxu0 %v472
    %1046 = vmatpush1.msra.mxu0 %v471
    %1047 = vmatprep.subr.mxu0 %v476
    %1048 = vmatpush1.msra.mxu0 %v475
    %1049 = vmatprep.subr.mxu0 %v480
    %1050 = vmatpush1.msra.mxu0 %v479
    %1051 = vmatprep.subr.mxu0 %v484
    %1052 = vmatpush1.msra.mxu0 %v483
    %1053 = vmatprep.subr.mxu0 %v488
    %1054 = vmatpush1.msra.mxu0 %v487
    %1055 = vmatprep.subr.mxu0 %v492
    %1056 = vmatpush1.msra.mxu0 %v491
    %1057 = vmatprep.subr.mxu0 %v496
    %1058 = vmatpush1.msra.mxu0 %v495
    %1059 = vmatprep.subr.mxu0 %v500
    %1060 = vmatpush1.msra.mxu0 %v499
    %1061 = vmatprep.subr.mxu0 %v504
    %1062 = vmatpush1.msra.mxu0 %v503
    %1063 = vmatprep.subr.mxu0 %v508
    %1064 = vmatpush1.msra.mxu0 %v507
    %1065 = vmatprep.subr.mxu0 %v512
    %1066 = vmatpush1.msra.mxu0 %v511
    %1067 = vmatprep.subr.mxu0 %v516
    %1068 = vmatpush1.msra.mxu0 %v515
    %1069 = vmatprep.subr.mxu0 %v520
    %1070 = vmatpush1.msra.mxu0 %v519
    %1071 = vmatprep.subr.mxu0 %v524
    %1072 = vmatpush1.msra.mxu0 %v523
    %1073 = vmatprep.subr.mxu0 %v528
    %1074 = vmatpush1.msra.mxu0 %v527
    %1075 = vmatprep.subr.mxu0 %v532
    %1076 = vmatpush1.msra.mxu0 %v531
    %1077 = vmatprep.subr.mxu0 0.0
    %1078 = vmatpush1.msra.mxu0 0.0
    %1079 = vmatprep.subr.mxu0 0.0
    %1080 = vmatpush1.msra.mxu0 0.0
    %1081 = vmatprep.subr.mxu0 0.0
    %1082 = vmatpush1.msra.mxu0 0.0
    %1083 = vmatprep.subr.mxu0 0.0
    %1084 = vmatpush1.msra.mxu0 0.0
    %1085 = vmatprep.subr.mxu0 0.0
    %1086 = vmatpush1.msra.mxu0 0.0
    %1087 = vmatprep.subr.mxu0 0.0
    %1088 = vmatpush1.msra.mxu0 0.0
    %1089 = vmatprep.subr.mxu0 0.0
    %1090 = vmatpush1.msra.mxu0 0.0
    %1091 = vmatprep.subr.mxu0 0.0
    %1092 = vmatpush1.msra.mxu0 0.0
    %1093 = vmatprep.subr.mxu0 0.0
    %1094 = vmatpush1.msra.mxu0 0.0
    %1095 = vmatprep.subr.mxu0 0.0
    %1096 = vmatpush1.msra.mxu0 0.0
    %1097 = vmatprep.subr.mxu0 0.0
    %1098 = vmatpush1.msra.mxu0 0.0
    %1099 = vmatprep.subr.mxu0 0.0
    %1100 = vmatpush1.msra.mxu0 0.0
    %1101 = vmatprep.subr.mxu0 0.0
    %1102 = vmatpush1.msra.mxu0 0.0
    %1103 = vmatprep.subr.mxu0 0.0
    %1104 = vmatpush1.msra.mxu0 0.0
    %1105 = vmatprep.subr.mxu0 0.0
    %1106 = vmatpush1.msra.mxu0 0.0
    %1107 = vmatprep.subr.mxu0 0.0
    %1108 = vmatpush1.msra.mxu0 0.0
    %1109 = vmatprep.mubr.f32.mxu0 0.0
    %1110 = vmatmul.mubr.f32.gmra.mrb[0].mxu0 %v1044
    %v1111 = vpop.f32.mrb[0].mxu0
    %v1112 = vadd.f32 0.0, %v1111
    %v1113 = vpop.f32.mrb[0].mxu0
    %v1114 = vadd.f32 0.0, %v1113
    %1115 = vdwg.mxu0
    %1116 = vmatprep.subr.mxu0 %v474
    %1117 = vmatpush1.msra.mxu0 %v473
    %1118 = vmatprep.subr.mxu0 %v478
    %1119 = vmatpush1.msra.mxu0 %v477
    %1120 = vmatprep.subr.mxu0 %v482
    %1121 = vmatpush1.msra.mxu0 %v481
    %1122 = vmatprep.subr.mxu0 %v486
    %1123 = vmatpush1.msra.mxu0 %v485
    %1124 = vmatprep.subr.mxu0 %v490
    %1125 = vmatpush1.msra.mxu0 %v489
    %1126 = vmatprep.subr.mxu0 %v494
    %1127 = vmatpush1.msra.mxu0 %v493
    %1128 = vmatprep.subr.mxu0 %v498
    %1129 = vmatpush1.msra.mxu0 %v497
    %1130 = vmatprep.subr.mxu0 %v502
    %1131 = vmatpush1.msra.mxu0 %v501
    %1132 = vmatprep.subr.mxu0 %v506
    %1133 = vmatpush1.msra.mxu0 %v505
    %1134 = vmatprep.subr.mxu0 %v510
    %1135 = vmatpush1.msra.mxu0 %v509
    %1136 = vmatprep.subr.mxu0 %v514
    %1137 = vmatpush1.msra.mxu0 %v513
    %1138 = vmatprep.subr.mxu0 %v518
    %1139 = vmatpush1.msra.mxu0 %v517
    %1140 = vmatprep.subr.mxu0 %v522
    %1141 = vmatpush1.msra.mxu0 %v521
    %1142 = vmatprep.subr.mxu0 %v526
    %1143 = vmatpush1.msra.mxu0 %v525
    %1144 = vmatprep.subr.mxu0 %v530
    %1145 = vmatpush1.msra.mxu0 %v529
    %1146 = vmatprep.subr.mxu0 %v534
    %1147 = vmatpush1.msra.mxu0 %v533
    %1148 = vmatprep.subr.mxu0 0.0
    %1149 = vmatpush1.msra.mxu0 0.0
    %1150 = vmatprep.subr.mxu0 0.0
    %1151 = vmatpush1.msra.mxu0 0.0
    %1152 = vmatprep.subr.mxu0 0.0
    %1153 = vmatpush1.msra.mxu0 0.0
    %1154 = vmatprep.subr.mxu0 0.0
    %1155 = vmatpush1.msra.mxu0 0.0
    %1156 = vmatprep.subr.mxu0 0.0
    %1157 = vmatpush1.msra.mxu0 0.0
    %1158 = vmatprep.subr.mxu0 0.0
    %1159 = vmatpush1.msra.mxu0 0.0
    %1160 = vmatprep.subr.mxu0 0.0
    %1161 = vmatpush1.msra.mxu0 0.0
    %1162 = vmatprep.subr.mxu0 0.0
    %1163 = vmatpush1.msra.mxu0 0.0
    %1164 = vmatprep.subr.mxu0 0.0
    %1165 = vmatpush1.msra.mxu0 0.0
    %1166 = vmatprep.subr.mxu0 0.0
    %1167 = vmatpush1.msra.mxu0 0.0
    %1168 = vmatprep.subr.mxu0 0.0
    %1169 = vmatpush1.msra.mxu0 0.0
    %1170 = vmatprep.subr.mxu0 0.0
    %1171 = vmatpush1.msra.mxu0 0.0
    %1172 = vmatprep.subr.mxu0 0.0
    %1173 = vmatpush1.msra.mxu0 0.0
    %1174 = vmatprep.subr.mxu0 0.0
    %1175 = vmatpush1.msra.mxu0 0.0
    %1176 = vmatprep.subr.mxu0 0.0
    %1177 = vmatpush1.msra.mxu0 0.0
    %1178 = vmatprep.subr.mxu0 0.0
    %1179 = vmatpush1.msra.mxu0 0.0
    %1180 = vmatprep.mubr.f32.mxu0 0.0
    %1181 = vmatmul.mubr.f32.gmra.mrb[0].mxu0 %v1044
    %v1182 = vpop.f32.mrb[0].mxu0
    %v1183 = vadd.f32 0.0, %v1182
    %v1184 = vpop.f32.mrb[0].mxu0
    %v1185 = vadd.f32 0.0, %v1184
    %1186 = vdwg.mxu0
    %v1187 = vadd.f32 %v330, %v1112
    %v1188 = vadd.f32 %v332, %v1114
    %v1189 = vadd.f32 %v443, %v1183
    %v1190 = vadd.f32 %v445, %v1185
    %v1191 = vxor.u32 %v1187, 2147483648
    %v1192 = vmul.f32 %v1191, 1.442695
    %v1193 = vpow.pop %v1192
    %v1194 = vadd.f32 %v1193, 1.0
    %v1195 = vrcp.pop %v1194
    %v1196 = vmul.f32 1.0, %v1195
    %v1197 = vxor.u32 %v1188, 2147483648
    %v1198 = vmul.f32 %v1197, 1.442695
    %v1199 = vpow.pop %v1198
    %v1200 = vadd.f32 %v1199, 1.0
    %v1201 = vrcp.pop %v1200
    %v1202 = vmul.f32 1.0, %v1201
    %v1203 = vtanh.pop %v1189
    %v1204 = vxor.u32 %v1190, 2147483648
    %v1205 = vmul.f32 %v1204, 1.442695
    %v1206 = vpow.pop %v1205
    %v1207 = vadd.f32 %v1206, 1.0
    %v1208 = vrcp.pop %v1207
    %v1209 = vmul.f32 1.0, %v1208
    %v1210 = vmul.f32 %v1202, %v1042
    %v1211 = vmul.f32 %v1196, %v1203
    %v1212 = vadd.f32 %v1210, %v1211
    %v1213 = vtanh.pop %v1212
    %v1214 = vmul.f32 %v1209, %v1213
    %1215 = vmatprep.subr.mxu0 %v472
    %1216 = vmatpush1.msra.mxu0 %v471
    %1217 = vmatprep.subr.mxu0 %v476
    %1218 = vmatpush1.msra.mxu0 %v475
    %1219 = vmatprep.subr.mxu0 %v480
    %1220 = vmatpush1.msra.mxu0 %v479
    %1221 = vmatprep.subr.mxu0 %v484
    %1222 = vmatpush1.msra.mxu0 %v483
    %1223 = vmatprep.subr.mxu0 %v488
    %1224 = vmatpush1.msra.mxu0 %v487
    %1225 = vmatprep.subr.mxu0 %v492
    %1226 = vmatpush1.msra.mxu0 %v491
    %1227 = vmatprep.subr.mxu0 %v496
    %1228 = vmatpush1.msra.mxu0 %v495
    %1229 = vmatprep.subr.mxu0 %v500
    %1230 = vmatpush1.msra.mxu0 %v499
    %1231 = vmatprep.subr.mxu0 %v504
    %1232 = vmatpush1.msra.mxu0 %v503
    %1233 = vmatprep.subr.mxu0 %v508
    %1234 = vmatpush1.msra.mxu0 %v507
    %1235 = vmatprep.subr.mxu0 %v512
    %1236 = vmatpush1.msra.mxu0 %v511
    %1237 = vmatprep.subr.mxu0 %v516
    %1238 = vmatpush1.msra.mxu0 %v515
    %1239 = vmatprep.subr.mxu0 %v520
    %1240 = vmatpush1.msra.mxu0 %v519
    %1241 = vmatprep.subr.mxu0 %v524
    %1242 = vmatpush1.msra.mxu0 %v523
    %1243 = vmatprep.subr.mxu0 %v528
    %1244 = vmatpush1.msra.mxu0 %v527
    %1245 = vmatprep.subr.mxu0 %v532
    %1246 = vmatpush1.msra.mxu0 %v531
    %1247 = vmatprep.subr.mxu0 0.0
    %1248 = vmatpush1.msra.mxu0 0.0
    %1249 = vmatprep.subr.mxu0 0.0
    %1250 = vmatpush1.msra.mxu0 0.0
    %1251 = vmatprep.subr.mxu0 0.0
    %1252 = vmatpush1.msra.mxu0 0.0
    %1253 = vmatprep.subr.mxu0 0.0
    %1254 = vmatpush1.msra.mxu0 0.0
    %1255 = vmatprep.subr.mxu0 0.0
    %1256 = vmatpush1.msra.mxu0 0.0
    %1257 = vmatprep.subr.mxu0 0.0
    %1258 = vmatpush1.msra.mxu0 0.0
    %1259 = vmatprep.subr.mxu0 0.0
    %1260 = vmatpush1.msra.mxu0 0.0
    %1261 = vmatprep.subr.mxu0 0.0
    %1262 = vmatpush1.msra.mxu0 0.0
    %1263 = vmatprep.subr.mxu0 0.0
    %1264 = vmatpush1.msra.mxu0 0.0
    %1265 = vmatprep.subr.mxu0 0.0
    %1266 = vmatpush1.msra.mxu0 0.0
    %1267 = vmatprep.subr.mxu0 0.0
    %1268 = vmatpush1.msra.mxu0 0.0
    %1269 = vmatprep.subr.mxu0 0.0
    %1270 = vmatpush1.msra.mxu0 0.0
    %1271 = vmatprep.subr.mxu0 0.0
    %1272 = vmatpush1.msra.mxu0 0.0
    %1273 = vmatprep.subr.mxu0 0.0
    %1274 = vmatpush1.msra.mxu0 0.0
    %1275 = vmatprep.subr.mxu0 0.0
    %1276 = vmatpush1.msra.mxu0 0.0
    %1277 = vmatprep.subr.mxu0 0.0
    %1278 = vmatpush1.msra.mxu0 0.0
    %1279 = vmatprep.mubr.f32.mxu0 0.0
    %1280 = vmatmul.mubr.f32.gmra.mrb[0].mxu0 %v1214
    %v1281 = vpop.f32.mrb[0].mxu0
    %v1282 = vadd.f32 0.0, %v1281
    %v1283 = vpop.f32.mrb[0].mxu0
    %v1284 = vadd.f32 0.0, %v1283
    %1285 = vdwg.mxu0
    %1286 = vmatprep.subr.mxu0 %v474
    %1287 = vmatpush1.msra.mxu0 %v473
    %1288 = vmatprep.subr.mxu0 %v478
    %1289 = vmatpush1.msra.mxu0 %v477
    %1290 = vmatprep.subr.mxu0 %v482
    %1291 = vmatpush1.msra.mxu0 %v481
    %1292 = vmatprep.subr.mxu0 %v486
    %1293 = vmatpush1.msra.mxu0 %v485
    %1294 = vmatprep.subr.mxu0 %v490
    %1295 = vmatpush1.msra.mxu0 %v489
    %1296 = vmatprep.subr.mxu0 %v494
    %1297 = vmatpush1.msra.mxu0 %v493
    %1298 = vmatprep.subr.mxu0 %v498
    %1299 = vmatpush1.msra.mxu0 %v497
    %1300 = vmatprep.subr.mxu0 %v502
    %1301 = vmatpush1.msra.mxu0 %v501
    %1302 = vmatprep.subr.mxu0 %v506
    %1303 = vmatpush1.msra.mxu0 %v505
    %1304 = vmatprep.subr.mxu0 %v510
    %1305 = vmatpush1.msra.mxu0 %v509
    %1306 = vmatprep.subr.mxu0 %v514
    %1307 = vmatpush1.msra.mxu0 %v513
    %1308 = vmatprep.subr.mxu0 %v518
    %1309 = vmatpush1.msra.mxu0 %v517
    %1310 = vmatprep.subr.mxu0 %v522
    %1311 = vmatpush1.msra.mxu0 %v521
    %1312 = vmatprep.subr.mxu0 %v526
    %1313 = vmatpush1.msra.mxu0 %v525
    %1314 = vmatprep.subr.mxu0 %v530
    %1315 = vmatpush1.msra.mxu0 %v529
    %1316 = vmatprep.subr.mxu0 %v534
    %1317 = vmatpush1.msra.mxu0 %v533
    %1318 = vmatprep.subr.mxu0 0.0
    %1319 = vmatpush1.msra.mxu0 0.0
    %1320 = vmatprep.subr.mxu0 0.0
    %1321 = vmatpush1.msra.mxu0 0.0
    %1322 = vmatprep.subr.mxu0 0.0
    %1323 = vmatpush1.msra.mxu0 0.0
    %1324 = vmatprep.subr.mxu0 0.0
    %1325 = vmatpush1.msra.mxu0 0.0
    %1326 = vmatprep.subr.mxu0 0.0
    %1327 = vmatpush1.msra.mxu0 0.0
    %1328 = vmatprep.subr.mxu0 0.0
    %1329 = vmatpush1.msra.mxu0 0.0
    %1330 = vmatprep.subr.mxu0 0.0
    %1331 = vmatpush1.msra.mxu0 0.0
    %1332 = vmatprep.subr.mxu0 0.0
    %1333 = vmatpush1.msra.mxu0 0.0
    %1334 = vmatprep.subr.mxu0 0.0
    %1335 = vmatpush1.msra.mxu0 0.0
    %1336 = vmatprep.subr.mxu0 0.0
    %1337 = vmatpush1.msra.mxu0 0.0
    %1338 = vmatprep.subr.mxu0 0.0
    %1339 = vmatpush1.msra.mxu0 0.0
    %1340 = vmatprep.subr.mxu0 0.0
    %1341 = vmatpush1.msra.mxu0 0.0
    %1342 = vmatprep.subr.mxu0 0.0
    %1343 = vmatpush1.msra.mxu0 0.0
    %1344 = vmatprep.subr.mxu0 0.0
    %1345 = vmatpush1.msra.mxu0 0.0
    %1346 = vmatprep.subr.mxu0 0.0
    %1347 = vmatpush1.msra.mxu0 0.0
    %1348 = vmatprep.subr.mxu0 0.0
    %1349 = vmatpush1.msra.mxu0 0.0
    %1350 = vmatprep.mubr.f32.mxu0 0.0
    %1351 = vmatmul.mubr.f32.gmra.mrb[0].mxu0 %v1214
    %v1352 = vpop.f32.mrb[0].mxu0
    %v1353 = vadd.f32 0.0, %v1352
    %v1354 = vpop.f32.mrb[0].mxu0
    %v1355 = vadd.f32 0.0, %v1354
    %1356 = vdwg.mxu0
    %v1357 = vadd.f32 %v336, %v1282
    %v1358 = vadd.f32 %v338, %v1284
    %v1359 = vadd.f32 %v449, %v1353
    %v1360 = vadd.f32 %v451, %v1355
    %v1361 = vxor.u32 %v1357, 2147483648
    %v1362 = vmul.f32 %v1361, 1.442695
    %v1363 = vpow.pop %v1362
    %v1364 = vadd.f32 %v1363, 1.0
    %v1365 = vrcp.pop %v1364
    %v1366 = vmul.f32 1.0, %v1365
    %v1367 = vxor.u32 %v1358, 2147483648
    %v1368 = vmul.f32 %v1367, 1.442695
    %v1369 = vpow.pop %v1368
    %v1370 = vadd.f32 %v1369, 1.0
    %v1371 = vrcp.pop %v1370
    %v1372 = vmul.f32 1.0, %v1371
    %v1373 = vtanh.pop %v1359
    %v1374 = vxor.u32 %v1360, 2147483648
    %v1375 = vmul.f32 %v1374, 1.442695
    %v1376 = vpow.pop %v1375
    %v1377 = vadd.f32 %v1376, 1.0
    %v1378 = vrcp.pop %v1377
    %v1379 = vmul.f32 1.0, %v1378
    %v1380 = vmul.f32 %v1372, %v1212
    %v1381 = vmul.f32 %v1366, %v1373
    %v1382 = vadd.f32 %v1380, %v1381
    %v1383 = vtanh.pop %v1382
    %v1384 = vmul.f32 %v1379, %v1383
    %1385 = vmatprep.subr.mxu0 %v472
    %1386 = vmatpush1.msra.mxu0 %v471
    %1387 = vmatprep.subr.mxu0 %v476
    %1388 = vmatpush1.msra.mxu0 %v475
    %1389 = vmatprep.subr.mxu0 %v480
    %1390 = vmatpush1.msra.mxu0 %v479
    %1391 = vmatprep.subr.mxu0 %v484
    %1392 = vmatpush1.msra.mxu0 %v483
    %1393 = vmatprep.subr.mxu0 %v488
    %1394 = vmatpush1.msra.mxu0 %v487
    %1395 = vmatprep.subr.mxu0 %v492
    %1396 = vmatpush1.msra.mxu0 %v491
    %1397 = vmatprep.subr.mxu0 %v496
    %1398 = vmatpush1.msra.mxu0 %v495
    %1399 = vmatprep.subr.mxu0 %v500
    %1400 = vmatpush1.msra.mxu0 %v499
    %1401 = vmatprep.subr.mxu0 %v504
    %1402 = vmatpush1.msra.mxu0 %v503
    %1403 = vmatprep.subr.mxu0 %v508
    %1404 = vmatpush1.msra.mxu0 %v507
    %1405 = vmatprep.subr.mxu0 %v512
    %1406 = vmatpush1.msra.mxu0 %v511
    %1407 = vmatprep.subr.mxu0 %v516
    %1408 = vmatpush1.msra.mxu0 %v515
    %1409 = vmatprep.subr.mxu0 %v520
    %1410 = vmatpush1.msra.mxu0 %v519
    %1411 = vmatprep.subr.mxu0 %v524
    %1412 = vmatpush1.msra.mxu0 %v523
    %1413 = vmatprep.subr.mxu0 %v528
    %1414 = vmatpush1.msra.mxu0 %v527
    %1415 = vmatprep.subr.mxu0 %v532
    %1416 = vmatpush1.msra.mxu0 %v531
    %1417 = vmatprep.subr.mxu0 0.0
    %1418 = vmatpush1.msra.mxu0 0.0
    %1419 = vmatprep.subr.mxu0 0.0
    %1420 = vmatpush1.msra.mxu0 0.0
    %1421 = vmatprep.subr.mxu0 0.0
    %1422 = vmatpush1.msra.mxu0 0.0
    %1423 = vmatprep.subr.mxu0 0.0
    %1424 = vmatpush1.msra.mxu0 0.0
    %1425 = vmatprep.subr.mxu0 0.0
    %1426 = vmatpush1.msra.mxu0 0.0
    %1427 = vmatprep.subr.mxu0 0.0
    %1428 = vmatpush1.msra.mxu0 0.0
    %1429 = vmatprep.subr.mxu0 0.0
    %1430 = vmatpush1.msra.mxu0 0.0
    %1431 = vmatprep.subr.mxu0 0.0
    %1432 = vmatpush1.msra.mxu0 0.0
    %1433 = vmatprep.subr.mxu0 0.0
    %1434 = vmatpush1.msra.mxu0 0.0
    %1435 = vmatprep.subr.mxu0 0.0
    %1436 = vmatpush1.msra.mxu0 0.0
    %1437 = vmatprep.subr.mxu0 0.0
    %1438 = vmatpush1.msra.mxu0 0.0
    %1439 = vmatprep.subr.mxu0 0.0
    %1440 = vmatpush1.msra.mxu0 0.0
    %1441 = vmatprep.subr.mxu0 0.0
    %1442 = vmatpush1.msra.mxu0 0.0
    %1443 = vmatprep.subr.mxu0 0.0
    %1444 = vmatpush1.msra.mxu0 0.0
    %1445 = vmatprep.subr.mxu0 0.0
    %1446 = vmatpush1.msra.mxu0 0.0
    %1447 = vmatprep.subr.mxu0 0.0
    %1448 = vmatpush1.msra.mxu0 0.0
    %1449 = vmatprep.mubr.f32.mxu0 0.0
    %1450 = vmatmul.mubr.f32.gmra.mrb[0].mxu0 %v1384
    %v1451 = vpop.f32.mrb[0].mxu0
    %v1452 = vadd.f32 0.0, %v1451
    %v1453 = vpop.f32.mrb[0].mxu0
    %v1454 = vadd.f32 0.0, %v1453
    %1455 = vdwg.mxu0
    %1456 = vmatprep.subr.mxu0 %v474
    %1457 = vmatpush1.msra.mxu0 %v473
    %1458 = vmatprep.subr.mxu0 %v478
    %1459 = vmatpush1.msra.mxu0 %v477
    %1460 = vmatprep.subr.mxu0 %v482
    %1461 = vmatpush1.msra.mxu0 %v481
    %1462 = vmatprep.subr.mxu0 %v486
    %1463 = vmatpush1.msra.mxu0 %v485
    %1464 = vmatprep.subr.mxu0 %v490
    %1465 = vmatpush1.msra.mxu0 %v489
    %1466 = vmatprep.subr.mxu0 %v494
    %1467 = vmatpush1.msra.mxu0 %v493
    %1468 = vmatprep.subr.mxu0 %v498
    %1469 = vmatpush1.msra.mxu0 %v497
    %1470 = vmatprep.subr.mxu0 %v502
    %1471 = vmatpush1.msra.mxu0 %v501
    %1472 = vmatprep.subr.mxu0 %v506
    %1473 = vmatpush1.msra.mxu0 %v505
    %1474 = vmatprep.subr.mxu0 %v510
    %1475 = vmatpush1.msra.mxu0 %v509
    %1476 = vmatprep.subr.mxu0 %v514
    %1477 = vmatpush1.msra.mxu0 %v513
    %1478 = vmatprep.subr.mxu0 %v518
    %1479 = vmatpush1.msra.mxu0 %v517
    %1480 = vmatprep.subr.mxu0 %v522
    %1481 = vmatpush1.msra.mxu0 %v521
    %1482 = vmatprep.subr.mxu0 %v526
    %1483 = vmatpush1.msra.mxu0 %v525
    %1484 = vmatprep.subr.mxu0 %v530
    %1485 = vmatpush1.msra.mxu0 %v529
    %1486 = vmatprep.subr.mxu0 %v534
    %1487 = vmatpush1.msra.mxu0 %v533
    %1488 = vmatprep.subr.mxu0 0.0
    %1489 = vmatpush1.msra.mxu0 0.0
    %1490 = vmatprep.subr.mxu0 0.0
    %1491 = vmatpush1.msra.mxu0 0.0
    %1492 = vmatprep.subr.mxu0 0.0
    %1493 = vmatpush1.msra.mxu0 0.0
    %1494 = vmatprep.subr.mxu0 0.0
    %1495 = vmatpush1.msra.mxu0 0.0
    %1496 = vmatprep.subr.mxu0 0.0
    %1497 = vmatpush1.msra.mxu0 0.0
    %1498 = vmatprep.subr.mxu0 0.0
    %1499 = vmatpush1.msra.mxu0 0.0
    %1500 = vmatprep.subr.mxu0 0.0
    %1501 = vmatpush1.msra.mxu0 0.0
    %1502 = vmatprep.subr.mxu0 0.0
    %1503 = vmatpush1.msra.mxu0 0.0
    %1504 = vmatprep.subr.mxu0 0.0
    %1505 = vmatpush1.msra.mxu0 0.0
    %1506 = vmatprep.subr.mxu0 0.0
    %1507 = vmatpush1.msra.mxu0 0.0
    %1508 = vmatprep.subr.mxu0 0.0
    %1509 = vmatpush1.msra.mxu0 0.0
    %1510 = vmatprep.subr.mxu0 0.0
    %1511 = vmatpush1.msra.mxu0 0.0
    %1512 = vmatprep.subr.mxu0 0.0
    %1513 = vmatpush1.msra.mxu0 0.0
    %1514 = vmatprep.subr.mxu0 0.0
    %1515 = vmatpush1.msra.mxu0 0.0
    %1516 = vmatprep.subr.mxu0 0.0
    %1517 = vmatpush1.msra.mxu0 0.0
    %1518 = vmatprep.subr.mxu0 0.0
    %1519 = vmatpush1.msra.mxu0 0.0
    %1520 = vmatprep.mubr.f32.mxu0 0.0
    %1521 = vmatmul.mubr.f32.gmra.mrb[0].mxu0 %v1384
    %v1522 = vpop.f32.mrb[0].mxu0
    %v1523 = vadd.f32 0.0, %v1522
    %v1524 = vpop.f32.mrb[0].mxu0
    %v1525 = vadd.f32 0.0, %v1524
    %1526 = vdwg.mxu0
    %v1527 = vadd.f32 %v342, %v1452
    %v1528 = vadd.f32 %v344, %v1454
    %v1529 = vadd.f32 %v455, %v1523
    %v1530 = vadd.f32 %v457, %v1525
    %v1531 = vxor.u32 %v1527, 2147483648
    %v1532 = vmul.f32 %v1531, 1.442695
    %v1533 = vpow.pop %v1532
    %v1534 = vadd.f32 %v1533, 1.0
    %v1535 = vrcp.pop %v1534
    %v1536 = vmul.f32 1.0, %v1535
    %v1537 = vxor.u32 %v1528, 2147483648
    %v1538 = vmul.f32 %v1537, 1.442695
    %v1539 = vpow.pop %v1538
    %v1540 = vadd.f32 %v1539, 1.0
    %v1541 = vrcp.pop %v1540
    %v1542 = vmul.f32 1.0, %v1541
    %v1543 = vtanh.pop %v1529
    %v1544 = vxor.u32 %v1530, 2147483648
    %v1545 = vmul.f32 %v1544, 1.442695
    %v1546 = vpow.pop %v1545
    %v1547 = vadd.f32 %v1546, 1.0
    %v1548 = vrcp.pop %v1547
    %v1549 = vmul.f32 1.0, %v1548
    %v1550 = vmul.f32 %v1542, %v1382
    %v1551 = vmul.f32 %v1536, %v1543
    %v1552 = vadd.f32 %v1550, %v1551
    %v1553 = vtanh.pop %v1552
    %v1554 = vmul.f32 %v1549, %v1553
    %1555 = vmatprep.subr.mxu0 %v472
    %1556 = vmatpush1.msra.mxu0 %v471
    %1557 = vmatprep.subr.mxu0 %v476
    %1558 = vmatpush1.msra.mxu0 %v475
    %1559 = vmatprep.subr.mxu0 %v480
    %1560 = vmatpush1.msra.mxu0 %v479
    %1561 = vmatprep.subr.mxu0 %v484
    %1562 = vmatpush1.msra.mxu0 %v483
    %1563 = vmatprep.subr.mxu0 %v488
    %1564 = vmatpush1.msra.mxu0 %v487
    %1565 = vmatprep.subr.mxu0 %v492
    %1566 = vmatpush1.msra.mxu0 %v491
    %1567 = vmatprep.subr.mxu0 %v496
    %1568 = vmatpush1.msra.mxu0 %v495
    %1569 = vmatprep.subr.mxu0 %v500
    %1570 = vmatpush1.msra.mxu0 %v499
    %1571 = vmatprep.subr.mxu0 %v504
    %1572 = vmatpush1.msra.mxu0 %v503
    %1573 = vmatprep.subr.mxu0 %v508
    %1574 = vmatpush1.msra.mxu0 %v507
    %1575 = vmatprep.subr.mxu0 %v512
    %1576 = vmatpush1.msra.mxu0 %v511
    %1577 = vmatprep.subr.mxu0 %v516
    %1578 = vmatpush1.msra.mxu0 %v515
    %1579 = vmatprep.subr.mxu0 %v520
    %1580 = vmatpush1.msra.mxu0 %v519
    %1581 = vmatprep.subr.mxu0 %v524
    %1582 = vmatpush1.msra.mxu0 %v523
    %1583 = vmatprep.subr.mxu0 %v528
    %1584 = vmatpush1.msra.mxu0 %v527
    %1585 = vmatprep.subr.mxu0 %v532
    %1586 = vmatpush1.msra.mxu0 %v531
    %1587 = vmatprep.subr.mxu0 0.0
    %1588 = vmatpush1.msra.mxu0 0.0
    %1589 = vmatprep.subr.mxu0 0.0
    %1590 = vmatpush1.msra.mxu0 0.0
    %1591 = vmatprep.subr.mxu0 0.0
    %1592 = vmatpush1.msra.mxu0 0.0
    %1593 = vmatprep.subr.mxu0 0.0
    %1594 = vmatpush1.msra.mxu0 0.0
    %1595 = vmatprep.subr.mxu0 0.0
    %1596 = vmatpush1.msra.mxu0 0.0
    %1597 = vmatprep.subr.mxu0 0.0
    %1598 = vmatpush1.msra.mxu0 0.0
    %1599 = vmatprep.subr.mxu0 0.0
    %1600 = vmatpush1.msra.mxu0 0.0
    %1601 = vmatprep.subr.mxu0 0.0
    %1602 = vmatpush1.msra.mxu0 0.0
    %1603 = vmatprep.subr.mxu0 0.0
    %1604 = vmatpush1.msra.mxu0 0.0
    %1605 = vmatprep.subr.mxu0 0.0
    %1606 = vmatpush1.msra.mxu0 0.0
    %1607 = vmatprep.subr.mxu0 0.0
    %1608 = vmatpush1.msra.mxu0 0.0
    %1609 = vmatprep.subr.mxu0 0.0
    %1610 = vmatpush1.msra.mxu0 0.0
    %1611 = vmatprep.subr.mxu0 0.0
    %1612 = vmatpush1.msra.mxu0 0.0
    %1613 = vmatprep.subr.mxu0 0.0
    %1614 = vmatpush1.msra.mxu0 0.0
    %1615 = vmatprep.subr.mxu0 0.0
    %1616 = vmatpush1.msra.mxu0 0.0
    %1617 = vmatprep.subr.mxu0 0.0
    %1618 = vmatpush1.msra.mxu0 0.0
    %1619 = vmatprep.mubr.f32.mxu0 0.0
    %1620 = vmatmul.mubr.f32.gmra.mrb[0].mxu0 %v1554
    %v1621 = vpop.f32.mrb[0].mxu0
    %v1622 = vadd.f32 0.0, %v1621
    %v1623 = vpop.f32.mrb[0].mxu0
    %v1624 = vadd.f32 0.0, %v1623
    %1625 = vdwg.mxu0
    %1626 = vmatprep.subr.mxu0 %v474
    %1627 = vmatpush1.msra.mxu0 %v473
    %1628 = vmatprep.subr.mxu0 %v478
    %1629 = vmatpush1.msra.mxu0 %v477
    %1630 = vmatprep.subr.mxu0 %v482
    %1631 = vmatpush1.msra.mxu0 %v481
    %1632 = vmatprep.subr.mxu0 %v486
    %1633 = vmatpush1.msra.mxu0 %v485
    %1634 = vmatprep.subr.mxu0 %v490
    %1635 = vmatpush1.msra.mxu0 %v489
    %1636 = vmatprep.subr.mxu0 %v494
    %1637 = vmatpush1.msra.mxu0 %v493
    %1638 = vmatprep.subr.mxu0 %v498
    %1639 = vmatpush1.msra.mxu0 %v497
    %1640 = vmatprep.subr.mxu0 %v502
    %1641 = vmatpush1.msra.mxu0 %v501
    %1642 = vmatprep.subr.mxu0 %v506
    %1643 = vmatpush1.msra.mxu0 %v505
    %1644 = vmatprep.subr.mxu0 %v510
    %1645 = vmatpush1.msra.mxu0 %v509
    %1646 = vmatprep.subr.mxu0 %v514
    %1647 = vmatpush1.msra.mxu0 %v513
    %1648 = vmatprep.subr.mxu0 %v518
    %1649 = vmatpush1.msra.mxu0 %v517
    %1650 = vmatprep.subr.mxu0 %v522
    %1651 = vmatpush1.msra.mxu0 %v521
    %1652 = vmatprep.subr.mxu0 %v526
    %1653 = vmatpush1.msra.mxu0 %v525
    %1654 = vmatprep.subr.mxu0 %v530
    %1655 = vmatpush1.msra.mxu0 %v529
    %1656 = vmatprep.subr.mxu0 %v534
    %1657 = vmatpush1.msra.mxu0 %v533
    %1658 = vmatprep.subr.mxu0 0.0
    %1659 = vmatpush1.msra.mxu0 0.0
    %1660 = vmatprep.subr.mxu0 0.0
    %1661 = vmatpush1.msra.mxu0 0.0
    %1662 = vmatprep.subr.mxu0 0.0
    %1663 = vmatpush1.msra.mxu0 0.0
    %1664 = vmatprep.subr.mxu0 0.0
    %1665 = vmatpush1.msra.mxu0 0.0
    %1666 = vmatprep.subr.mxu0 0.0
    %1667 = vmatpush1.msra.mxu0 0.0
    %1668 = vmatprep.subr.mxu0 0.0
    %1669 = vmatpush1.msra.mxu0 0.0
    %1670 = vmatprep.subr.mxu0 0.0
    %1671 = vmatpush1.msra.mxu0 0.0
    %1672 = vmatprep.subr.mxu0 0.0
    %1673 = vmatpush1.msra.mxu0 0.0
    %1674 = vmatprep.subr.mxu0 0.0
    %1675 = vmatpush1.msra.mxu0 0.0
    %1676 = vmatprep.subr.mxu0 0.0
    %1677 = vmatpush1.msra.mxu0 0.0
    %1678 = vmatprep.subr.mxu0 0.0
    %1679 = vmatpush1.msra.mxu0 0.0
    %1680 = vmatprep.subr.mxu0 0.0
    %1681 = vmatpush1.msra.mxu0 0.0
    %1682 = vmatprep.subr.mxu0 0.0
    %1683 = vmatpush1.msra.mxu0 0.0
    %1684 = vmatprep.subr.mxu0 0.0
    %1685 = vmatpush1.msra.mxu0 0.0
    %1686 = vmatprep.subr.mxu0 0.0
    %1687 = vmatpush1.msra.mxu0 0.0
    %1688 = vmatprep.subr.mxu0 0.0
    %1689 = vmatpush1.msra.mxu0 0.0
    %1690 = vmatprep.mubr.f32.mxu0 0.0
    %1691 = vmatmul.mubr.f32.gmra.mrb[0].mxu0 %v1554
    %v1692 = vpop.f32.mrb[0].mxu0
    %v1693 = vadd.f32 0.0, %v1692
    %v1694 = vpop.f32.mrb[0].mxu0
    %v1695 = vadd.f32 0.0, %v1694
    %1696 = vdwg.mxu0
    %v1697 = vadd.f32 %v348, %v1622
    %v1698 = vadd.f32 %v350, %v1624
    %v1699 = vadd.f32 %v461, %v1693
    %v1700 = vadd.f32 %v463, %v1695
    %v1701 = vxor.u32 %v1697, 2147483648
    %v1702 = vmul.f32 %v1701, 1.442695
    %v1703 = vpow.pop %v1702
    %v1704 = vadd.f32 %v1703, 1.0
    %v1705 = vrcp.pop %v1704
    %v1706 = vmul.f32 1.0, %v1705
    %v1707 = vxor.u32 %v1698, 2147483648
    %v1708 = vmul.f32 %v1707, 1.442695
    %v1709 = vpow.pop %v1708
    %v1710 = vadd.f32 %v1709, 1.0
    %v1711 = vrcp.pop %v1710
    %v1712 = vmul.f32 1.0, %v1711
    %v1713 = vtanh.pop %v1699
    %v1714 = vxor.u32 %v1700, 2147483648
    %v1715 = vmul.f32 %v1714, 1.442695
    %v1716 = vpow.pop %v1715
    %v1717 = vadd.f32 %v1716, 1.0
    %v1718 = vrcp.pop %v1717
    %v1719 = vmul.f32 1.0, %v1718
    %v1720 = vmul.f32 %v1712, %v1552
    %v1721 = vmul.f32 %v1706, %v1713
    %v1722 = vadd.f32 %v1720, %v1721
    %v1723 = vtanh.pop %v1722
    %v1724 = vmul.f32 %v1719, %v1723
    %1725 = vmatprep.subr.mxu0 %v472
    %1726 = vmatpush1.msra.mxu0 %v471
    %1727 = vmatprep.subr.mxu0 %v476
    %1728 = vmatpush1.msra.mxu0 %v475
    %1729 = vmatprep.subr.mxu0 %v480
    %1730 = vmatpush1.msra.mxu0 %v479
    %1731 = vmatprep.subr.mxu0 %v484
    %1732 = vmatpush1.msra.mxu0 %v483
    %1733 = vmatprep.subr.mxu0 %v488
    %1734 = vmatpush1.msra.mxu0 %v487
    %1735 = vmatprep.subr.mxu0 %v492
    %1736 = vmatpush1.msra.mxu0 %v491
    %1737 = vmatprep.subr.mxu0 %v496
    %1738 = vmatpush1.msra.mxu0 %v495
    %1739 = vmatprep.subr.mxu0 %v500
    %1740 = vmatpush1.msra.mxu0 %v499
    %1741 = vmatprep.subr.mxu0 %v504
    %1742 = vmatpush1.msra.mxu0 %v503
    %1743 = vmatprep.subr.mxu0 %v508
    %1744 = vmatpush1.msra.mxu0 %v507
    %1745 = vmatprep.subr.mxu0 %v512
    %1746 = vmatpush1.msra.mxu0 %v511
    %1747 = vmatprep.subr.mxu0 %v516
    %1748 = vmatpush1.msra.mxu0 %v515
    %1749 = vmatprep.subr.mxu0 %v520
    %1750 = vmatpush1.msra.mxu0 %v519
    %1751 = vmatprep.subr.mxu0 %v524
    %1752 = vmatpush1.msra.mxu0 %v523
    %1753 = vmatprep.subr.mxu0 %v528
    %1754 = vmatpush1.msra.mxu0 %v527
    %1755 = vmatprep.subr.mxu0 %v532
    %1756 = vmatpush1.msra.mxu0 %v531
    %1757 = vmatprep.subr.mxu0 0.0
    %1758 = vmatpush1.msra.mxu0 0.0
    %1759 = vmatprep.subr.mxu0 0.0
    %1760 = vmatpush1.msra.mxu0 0.0
    %1761 = vmatprep.subr.mxu0 0.0
    %1762 = vmatpush1.msra.mxu0 0.0
    %1763 = vmatprep.subr.mxu0 0.0
    %1764 = vmatpush1.msra.mxu0 0.0
    %1765 = vmatprep.subr.mxu0 0.0
    %1766 = vmatpush1.msra.mxu0 0.0
    %1767 = vmatprep.subr.mxu0 0.0
    %1768 = vmatpush1.msra.mxu0 0.0
    %1769 = vmatprep.subr.mxu0 0.0
    %1770 = vmatpush1.msra.mxu0 0.0
    %1771 = vmatprep.subr.mxu0 0.0
    %1772 = vmatpush1.msra.mxu0 0.0
    %1773 = vmatprep.subr.mxu0 0.0
    %1774 = vmatpush1.msra.mxu0 0.0
    %1775 = vmatprep.subr.mxu0 0.0
    %1776 = vmatpush1.msra.mxu0 0.0
    %1777 = vmatprep.subr.mxu0 0.0
    %1778 = vmatpush1.msra.mxu0 0.0
    %1779 = vmatprep.subr.mxu0 0.0
    %1780 = vmatpush1.msra.mxu0 0.0
    %1781 = vmatprep.subr.mxu0 0.0
    %1782 = vmatpush1.msra.mxu0 0.0
    %1783 = vmatprep.subr.mxu0 0.0
    %1784 = vmatpush1.msra.mxu0 0.0
    %1785 = vmatprep.subr.mxu0 0.0
    %1786 = vmatpush1.msra.mxu0 0.0
    %1787 = vmatprep.subr.mxu0 0.0
    %1788 = vmatpush1.msra.mxu0 0.0
    %1789 = vmatprep.mubr.f32.mxu0 0.0
    %1790 = vmatmul.mubr.f32.gmra.mrb[0].mxu0 %v1724
    %v1791 = vpop.f32.mrb[0].mxu0
    %v1792 = vadd.f32 0.0, %v1791
    %v1793 = vpop.f32.mrb[0].mxu0
    %v1794 = vadd.f32 0.0, %v1793
    %1795 = vdwg.mxu0
    %1796 = vmatprep.subr.mxu0 %v474
    %1797 = vmatpush1.msra.mxu0 %v473
    %1798 = vmatprep.subr.mxu0 %v478
    %1799 = vmatpush1.msra.mxu0 %v477
    %1800 = vmatprep.subr.mxu0 %v482
    %1801 = vmatpush1.msra.mxu0 %v481
    %1802 = vmatprep.subr.mxu0 %v486
    %1803 = vmatpush1.msra.mxu0 %v485
    %1804 = vmatprep.subr.mxu0 %v490
    %1805 = vmatpush1.msra.mxu0 %v489
    %1806 = vmatprep.subr.mxu0 %v494
    %1807 = vmatpush1.msra.mxu0 %v493
    %1808 = vmatprep.subr.mxu0 %v498
    %1809 = vmatpush1.msra.mxu0 %v497
    %1810 = vmatprep.subr.mxu0 %v502
    %1811 = vmatpush1.msra.mxu0 %v501
    %1812 = vmatprep.subr.mxu0 %v506
    %1813 = vmatpush1.msra.mxu0 %v505
    %1814 = vmatprep.subr.mxu0 %v510
    %1815 = vmatpush1.msra.mxu0 %v509
    %1816 = vmatprep.subr.mxu0 %v514
    %1817 = vmatpush1.msra.mxu0 %v513
    %1818 = vmatprep.subr.mxu0 %v518
    %1819 = vmatpush1.msra.mxu0 %v517
    %1820 = vmatprep.subr.mxu0 %v522
    %1821 = vmatpush1.msra.mxu0 %v521
    %1822 = vmatprep.subr.mxu0 %v526
    %1823 = vmatpush1.msra.mxu0 %v525
    %1824 = vmatprep.subr.mxu0 %v530
    %1825 = vmatpush1.msra.mxu0 %v529
    %1826 = vmatprep.subr.mxu0 %v534
    %1827 = vmatpush1.msra.mxu0 %v533
    %1828 = vmatprep.subr.mxu0 0.0
    %1829 = vmatpush1.msra.mxu0 0.0
    %1830 = vmatprep.subr.mxu0 0.0
    %1831 = vmatpush1.msra.mxu0 0.0
    %1832 = vmatprep.subr.mxu0 0.0
    %1833 = vmatpush1.msra.mxu0 0.0
    %1834 = vmatprep.subr.mxu0 0.0
    %1835 = vmatpush1.msra.mxu0 0.0
    %1836 = vmatprep.subr.mxu0 0.0
    %1837 = vmatpush1.msra.mxu0 0.0
    %1838 = vmatprep.subr.mxu0 0.0
    %1839 = vmatpush1.msra.mxu0 0.0
    %1840 = vmatprep.subr.mxu0 0.0
    %1841 = vmatpush1.msra.mxu0 0.0
    %1842 = vmatprep.subr.mxu0 0.0
    %1843 = vmatpush1.msra.mxu0 0.0
    %1844 = vmatprep.subr.mxu0 0.0
    %1845 = vmatpush1.msra.mxu0 0.0
    %1846 = vmatprep.subr.mxu0 0.0
    %1847 = vmatpush1.msra.mxu0 0.0
    %1848 = vmatprep.subr.mxu0 0.0
    %1849 = vmatpush1.msra.mxu0 0.0
    %1850 = vmatprep.subr.mxu0 0.0
    %1851 = vmatpush1.msra.mxu0 0.0
    %1852 = vmatprep.subr.mxu0 0.0
    %1853 = vmatpush1.msra.mxu0 0.0
    %1854 = vmatprep.subr.mxu0 0.0
    %1855 = vmatpush1.msra.mxu0 0.0
    %1856 = vmatprep.subr.mxu0 0.0
    %1857 = vmatpush1.msra.mxu0 0.0
    %1858 = vmatprep.subr.mxu0 0.0
    %1859 = vmatpush1.msra.mxu0 0.0
    %1860 = vmatprep.mubr.f32.mxu0 0.0
    %1861 = vmatmul.mubr.f32.gmra.mrb[0].mxu0 %v1724
    %v1862 = vpop.f32.mrb[0].mxu0
    %v1863 = vadd.f32 0.0, %v1862
    %v1864 = vpop.f32.mrb[0].mxu0
    %v1865 = vadd.f32 0.0, %v1864
    %1866 = vdwg.mxu0
    %v1867 = vadd.f32 %v354, %v1792
    %v1868 = vadd.f32 %v356, %v1794
    %v1869 = vadd.f32 %v467, %v1863
    %v1870 = vadd.f32 %v469, %v1865
    %v1871 = vxor.u32 %v1867, 2147483648
    %v1872 = vmul.f32 %v1871, 1.442695
    %v1873 = vpow.pop %v1872
    %v1874 = vadd.f32 %v1873, 1.0
    %v1875 = vrcp.pop %v1874
    %v1876 = vmul.f32 1.0, %v1875
    %v1877 = vxor.u32 %v1868, 2147483648
    %v1878 = vmul.f32 %v1877, 1.442695
    %v1879 = vpow.pop %v1878
    %v1880 = vadd.f32 %v1879, 1.0
    %v1881 = vrcp.pop %v1880
    %v1882 = vmul.f32 1.0, %v1881
    %v1883 = vtanh.pop %v1869
    %v1884 = vxor.u32 %v1870, 2147483648
    %v1885 = vmul.f32 %v1884, 1.442695
    %v1886 = vpow.pop %v1885
    %v1887 = vadd.f32 %v1886, 1.0
    %v1888 = vrcp.pop %v1887
    %v1889 = vmul.f32 1.0, %v1888
    %v1890 = vmul.f32 %v1882, %v1722
    %v1891 = vmul.f32 %v1876, %v1883
    %v1892 = vadd.f32 %v1890, %v1891
    %v1893 = vtanh.pop %v1892
    %v1894 = vmul.f32 %v1889, %v1893
    %v1895 = vld [vmem:[#allocation8] sm:$0xff]
    %v1896 = vld [vmem:[#allocation8 + $0x8] sm:$0xff]
    %v1897 = vld [vmem:[#allocation8 + $0x10] sm:$0xff]
    %v1898 = vld [vmem:[#allocation8 + $0x18] sm:$0xff]
    %v1899 = vld [vmem:[#allocation8 + $0x20] sm:$0xff]
    %v1900 = vld [vmem:[#allocation8 + $0x28] sm:$0xff]
    %v1901 = vld [vmem:[#allocation8 + $0x30] sm:$0xff]
    %v1902 = vld [vmem:[#allocation8 + $0x38] sm:$0xff]
    %v1903 = vld [vmem:[#allocation8 + $0x40] sm:$0xff]
    %v1904 = vld [vmem:[#allocation8 + $0x48] sm:$0xff]
    %v1905 = vld [vmem:[#allocation8 + $0x50] sm:$0xff]
    %v1906 = vld [vmem:[#allocation8 + $0x58] sm:$0xff]
    %v1907 = vld [vmem:[#allocation8 + $0x60] sm:$0xff]
    %v1908 = vld [vmem:[#allocation8 + $0x68] sm:$0xff]
    %v1909 = vld [vmem:[#allocation8 + $0x70] sm:$0xff]
    %v1910 = vld [vmem:[#allocation8 + $0x78] sm:$0xff]
    %v1911 = vld [vmem:[%s5] sm:$0x1]
    %v1913 = vlaneseq
    %v1914 = vshrl.u32 %v1913, 7
    %v1915 = vsub.s32 0, %v1914
    %v1916 = vrot.slane %v1911, %v1915
    %1918 = vmatprep.subr.mxu0 0.0
    %1919 = vmatpush1.msra.mxu0 %v1895
    %1920 = vmatprep.subr.mxu0 0.0
    %1921 = vmatpush1.msra.mxu0 %v1896
    %1922 = vmatprep.subr.mxu0 0.0
    %1923 = vmatpush1.msra.mxu0 %v1897
    %1924 = vmatprep.subr.mxu0 0.0
    %1925 = vmatpush1.msra.mxu0 %v1898
    %1926 = vmatprep.subr.mxu0 0.0
    %1927 = vmatpush1.msra.mxu0 %v1899
    %1928 = vmatprep.subr.mxu0 0.0
    %1929 = vmatpush1.msra.mxu0 %v1900
    %1930 = vmatprep.subr.mxu0 0.0
    %1931 = vmatpush1.msra.mxu0 %v1901
    %1932 = vmatprep.subr.mxu0 0.0
    %1933 = vmatpush1.msra.mxu0 %v1902
    %1934 = vmatprep.subr.mxu0 0.0
    %1935 = vmatpush1.msra.mxu0 %v1903
    %1936 = vmatprep.subr.mxu0 0.0
    %1937 = vmatpush1.msra.mxu0 %v1904
    %1938 = vmatprep.subr.mxu0 0.0
    %1939 = vmatpush1.msra.mxu0 %v1905
    %1940 = vmatprep.subr.mxu0 0.0
    %1941 = vmatpush1.msra.mxu0 %v1906
    %1942 = vmatprep.subr.mxu0 0.0
    %1943 = vmatpush1.msra.mxu0 %v1907
    %1944 = vmatprep.subr.mxu0 0.0
    %1945 = vmatpush1.msra.mxu0 %v1908
    %1946 = vmatprep.subr.mxu0 0.0
    %1947 = vmatpush1.msra.mxu0 %v1909
    %1948 = vmatprep.subr.mxu0 0.0
    %1949 = vmatpush1.msra.mxu0 %v1910
    %1950 = vmatprep.subr.mxu0 0.0
    %1951 = vmatpush1.msra.mxu0 0.0
    %1952 = vmatprep.subr.mxu0 0.0
    %1953 = vmatpush1.msra.mxu0 0.0
    %1954 = vmatprep.subr.mxu0 0.0
    %1955 = vmatpush1.msra.mxu0 0.0
    %1956 = vmatprep.subr.mxu0 0.0
    %1957 = vmatpush1.msra.mxu0 0.0
    %1958 = vmatprep.subr.mxu0 0.0
    %1959 = vmatpush1.msra.mxu0 0.0
    %1960 = vmatprep.subr.mxu0 0.0
    %1961 = vmatpush1.msra.mxu0 0.0
    %1962 = vmatprep.subr.mxu0 0.0
    %1963 = vmatpush1.msra.mxu0 0.0
    %1964 = vmatprep.subr.mxu0 0.0
    %1965 = vmatpush1.msra.mxu0 0.0
    %1966 = vmatprep.subr.mxu0 0.0
    %1967 = vmatpush1.msra.mxu0 0.0
    %1968 = vmatprep.subr.mxu0 0.0
    %1969 = vmatpush1.msra.mxu0 0.0
    %1970 = vmatprep.subr.mxu0 0.0
    %1971 = vmatpush1.msra.mxu0 0.0
    %1972 = vmatprep.subr.mxu0 0.0
    %1973 = vmatpush1.msra.mxu0 0.0
    %1974 = vmatprep.subr.mxu0 0.0
    %1975 = vmatpush1.msra.mxu0 0.0
    %1976 = vmatprep.subr.mxu0 0.0
    %1977 = vmatpush1.msra.mxu0 0.0
    %1978 = vmatprep.subr.mxu0 0.0
    %1979 = vmatpush1.msra.mxu0 0.0
    %1980 = vmatprep.subr.mxu0 0.0
    %1981 = vmatpush1.msra.mxu0 0.0
    %1982 = vmatprep.mubr.f32.mxu0 0.0
    %1983 = vmatmul.mubr.f32.gmra.mrb[0].mxu0 %v1894
    %v1984 = vpop.f32.mrb[0].mxu0
    %v1985 = vadd.f32 %v1916, %v1984
    %v1986 = vpop.f32.mrb[0].mxu0
    %1987 = vdwg.mxu0
    %1988 = vst [vmem:[#allocation10] sm:$0xff] %v1985
    // Predicated region
    $region42: #{tpu_custom_call.1} parent=1 // pred_check
      _
    $region43: #{tpu_custom_call.1} parent=1 // pred_check_branch
      %1990 = sbr.rel (0) target = $region45
    $region44: #{tpu_custom_call.1} parent=1 // pred_region
      %s1992 = ssub.s32 128, 128
      %1993 = vsyncadd [#allocation4], %s1992
      %s1995 = sshll.u32 [#allocation10], 4
      %s1996 = int_to_ptr.vmem [resolvable:$true] %s1995
      %1998 = dma.vmem_to_hbm [thread:$0]  %s1996, 128, %s6, [#allocation4]
    $region45: #{tpu_custom_call.1} parent=1 // pred_fallthru
      _
    // Predicated region
    $region46: #{tpu_custom_call.1} parent=1 // pred_check
      _
    $region47: #{tpu_custom_call.1} parent=1 // pred_check_branch
      %2000 = sbr.rel (0) target = $region49
    $region48: #{tpu_custom_call.1} parent=1 // pred_region
      %2001 = dma.done [#allocation4], 128
    $region49: #{tpu_custom_call.1} parent=1 // pred_fallthru
      _
    %2002 = vsyncpa [#allocation3], 1
    %2003 = vsyncpa [#allocation6], 1
    %2004 = vsyncpa [#allocation9], 1
    %2005 = vsyncpa [#allocation4], 1

</llo_original>
